<compile_context>
chip_gen: v7x
topology: tpu7x:2x2x1
jax: 0.10.0
libtpu: 0.0.40
codegen_flags: <defaults>
</compile_context>

<pallas_src>
import jax
import jax.numpy as jnp
from jax.experimental import pallas as pl
from jax.experimental.pallas import tpu as pltpu


def _fused_kernel(x_ref, w_ref, s148_ref, scale_ref, bias_ref, res_ref, o_ref):
    # x_ref     : (Cin, P)        feature map (channels on sublanes, pixels on lanes)
    # w_ref     : (TCout, Cin)    raw conv weight tile
    # s148_ref  : (1, Cin)        runtime per-input-channel scale (lane-major row)
    # scale_ref : (TCout, 1)      folded BN scale  (gamma / sqrt(var + eps))
    # bias_ref  : (TCout, 1)      folded BN bias   (beta - mean * scale)
    # res_ref   : (TCout, P)      residual (x137) tile
    # o_ref     : (TCout, P)      output tile
    w_scaled = w_ref[...] * s148_ref[...]            # fold x148 into W's lane axis (free bcast)
    y = jnp.dot(w_scaled, x_ref[...],
                preferred_element_type=jnp.float32)  # 1x1 conv on the MXU
    o_ref[...] = jnp.maximum(
        y * scale_ref[...] + bias_ref[...] + res_ref[...], 0.0)  # BN + add + relu epilogue


def fused_mul_conv_bn_add_relu(x148, x143, x137, conv_w,
                               bn_gamma, bn_beta, bn_mean, bn_var,
                               eps=1e-5, cout_blocks=2):
    """All tensors in PyTorch NCHW convention; returns NCHW output.

    Requires N == 1 (the module spec), which makes NCHW identical to a
    (C, H*W) matrix — no layout transposes needed on either side.
    """
    N, Cin, H, W = x143.shape
    Cout = conv_w.shape[0]
    assert N == 1, "layout trick relies on N==1 (matches the module spec)"
    P = N * H * W
    assert Cout % cout_blocks == 0
    tco = Cout // cout_blocks
    assert tco % 8 == 0, "Cout tile must respect the (8, 128) sublane constraint"

    # Zero-copy views: NCHW with N==1 is already channel-major (C, H*W).
    x_cp = x143.reshape(Cin, P)
    res_cp = x137.reshape(Cout, P)
    w2d = conv_w.reshape(Cout, Cin)
    s148_row = x148.reshape(1, Cin)          # runtime scale, applied in-kernel

    # Eval-mode BN fold from *static parameters only* (tiny: 2 x 2.3 KB).
    bn_scale = (bn_gamma / jnp.sqrt(bn_var + eps)).reshape(Cout, 1)
    bn_bias = bn_beta.reshape(Cout, 1) - bn_mean.reshape(Cout, 1) * bn_scale

    cost = pl.CostEstimate(
        flops=2 * Cout * Cin * P,
        transcendentals=0,
        bytes_accessed=4 * (Cin * P + Cout * Cin + 2 * Cout * P + Cin + 2 * Cout),
    )

    out_cp = pl.pallas_call(
        _fused_kernel,
        out_shape=jax.ShapeDtypeStruct((Cout, P), jnp.float32),
        grid=(cout_blocks,),
        in_specs=[
            pl.BlockSpec((Cin, P), lambda i: (0, 0)),     # x: resident across grid steps
            pl.BlockSpec((tco, Cin), lambda i: (i, 0)),   # W tile over Cout
            pl.BlockSpec((1, Cin), lambda i: (0, 0)),     # x148 lane-major row
            pl.BlockSpec((tco, 1), lambda i: (i, 0)),     # BN scale column
            pl.BlockSpec((tco, 1), lambda i: (i, 0)),     # BN bias column
            pl.BlockSpec((tco, P), lambda i: (i, 0)),     # residual tile
        ],
        out_specs=pl.BlockSpec((tco, P), lambda i: (i, 0)),
        compiler_params=pltpu.CompilerParams(
            dimension_semantics=("parallel",)),           # 2-way split on v7x; harmless elsewhere
        cost_estimate=cost,
    )(x_cp, w2d, s148_row, bn_scale, bn_bias, res_cp)

    # (Cout, P) -> (1, Cout, H, W): pure metadata reshape (N == 1).
    return out_cp.reshape(N, Cout, H, W)


if __name__ == "__main__":
    # Shapes implied by the module: channels = 576, 14x14 spatial, N = 1.
    N, C, H, W = 1, 576, 14, 14
    key = jax.random.PRNGKey(0)
    k = jax.random.split(key, 8)

    x137 = jax.random.normal(k[0], (N, C, H, W), jnp.float32)
    x143 = jax.random.normal(k[1], (N, C, H, W), jnp.float32)
    x148 = jax.random.normal(k[2], (N, C, 1, 1), jnp.float32)

    # Deterministic synthetic parameters (no checkpoint load).
    conv_w = jax.random.normal(k[3], (C, C, 1, 1), jnp.float32) * 0.02
    bn_gamma = 1.0 + 0.1 * jax.random.normal(k[4], (C,), jnp.float32)
    bn_beta = 0.1 * jax.random.normal(k[5], (C,), jnp.float32)
    bn_mean = 0.1 * jax.random.normal(k[6], (C,), jnp.float32)
    bn_var = jnp.abs(jax.random.normal(k[7], (C,), jnp.float32)) + 0.5

    out = fused_mul_conv_bn_add_relu(x148, x143, x137, conv_w,
                                     bn_gamma, bn_beta, bn_mean, bn_var)
    jax.block_until_ready(out)

    # Plain-JAX reference of the original (unfolded) module semantics.
    x149 = x148 * x143
    x150 = jnp.einsum('nchw,oc->nohw', x149, conv_w.reshape(C, C))
    scale = bn_gamma / jnp.sqrt(bn_var + 1e-5)
    x151 = (x150 * scale[None, :, None, None]
            + (bn_beta - bn_mean * scale)[None, :, None, None])
    ref = jnp.maximum(x137 + x151, 0.0)

    assert out.shape == (N, C, H, W)
    assert jnp.allclose(out, ref, atol=1e-3, rtol=1e-3)

    print("KERNEL_OK")
</pallas_src>

<mosaic_0001>
module attributes {stable_mosaic.version = 11 : i64} {
  func.func @_fused_kernel(%arg0: i32, %arg1: memref<576x196xf32, #tpu.memory_space<vmem>>, %arg2: memref<288x576xf32, #tpu.memory_space<vmem>>, %arg3: memref<1x576xf32, #tpu.memory_space<vmem>>, %arg4: memref<288x1xf32, #tpu.memory_space<vmem>>, %arg5: memref<288x1xf32, #tpu.memory_space<vmem>>, %arg6: memref<288x196xf32, #tpu.memory_space<vmem>>, %arg7: memref<288x196xf32, #tpu.memory_space<vmem>>) attributes {dimension_semantics = [#tpu.dimension_semantics<parallel>], iteration_bounds = array<i64: 2>, scalar_prefetch = 0 : i64, scratch_operands = 0 : i64, tpu.core_type = #tpu.core_type<tc>, window_params = [{pipeline_mode = #tpu.pipeline_mode<synchronous>, transform_indices = @transform_0, window_bounds = array<i64: 576, 196>}, {transform_indices = @transform_1, window_bounds = array<i64: 288, 576>}, {pipeline_mode = #tpu.pipeline_mode<synchronous>, transform_indices = @transform_2, window_bounds = array<i64: 1, 576>}, {transform_indices = @transform_3, window_bounds = array<i64: 288, 1>}, {transform_indices = @transform_4, window_bounds = array<i64: 288, 1>}, {transform_indices = @transform_5, window_bounds = array<i64: 288, 196>}, {transform_indices = @transform_6, window_bounds = array<i64: 288, 196>}]} {
    %c0 = arith.constant 0 : index
    %c0_0 = arith.constant 0 : index
    %0 = vector.load %arg2[%c0, %c0_0] : memref<288x576xf32, #tpu.memory_space<vmem>>, vector<288x576xf32>
    %c0_1 = arith.constant 0 : index
    %c0_2 = arith.constant 0 : index
    %1 = vector.load %arg3[%c0_1, %c0_2] : memref<1x576xf32, #tpu.memory_space<vmem>>, vector<1x576xf32>
    %2 = vector.broadcast %1 : vector<1x576xf32> to vector<288x576xf32>
    %3 = arith.mulf %0, %2 : vector<288x576xf32>
    %c0_3 = arith.constant 0 : index
    %c0_4 = arith.constant 0 : index
    %4 = vector.load %arg1[%c0_3, %c0_4] : memref<576x196xf32, #tpu.memory_space<vmem>>, vector<576x196xf32>
    %cst = arith.constant dense<0.000000e+00> : vector<288x196xf32>
    %5 = tpu.matmul %3, %4, %cst {dimension_numbers = #tpu.dot_dimension_numbers<[1], [0], [0], [1], [0, 0, 1, 1], [], []>} : vector<288x576xf32>, vector<576x196xf32>, vector<288x196xf32> -> vector<288x196xf32>
    %c0_5 = arith.constant 0 : index
    %c0_6 = arith.constant 0 : index
    %6 = vector.load %arg4[%c0_5, %c0_6] : memref<288x1xf32, #tpu.memory_space<vmem>>, vector<288x1xf32>
    %7 = vector.broadcast %6 : vector<288x1xf32> to vector<288x196xf32>
    %8 = arith.mulf %5, %7 : vector<288x196xf32>
    %c0_7 = arith.constant 0 : index
    %c0_8 = arith.constant 0 : index
    %9 = vector.load %arg5[%c0_7, %c0_8] : memref<288x1xf32, #tpu.memory_space<vmem>>, vector<288x1xf32>
    %10 = vector.broadcast %9 : vector<288x1xf32> to vector<288x196xf32>
    %11 = arith.addf %8, %10 : vector<288x196xf32>
    %c0_9 = arith.constant 0 : index
    %c0_10 = arith.constant 0 : index
    %12 = vector.load %arg6[%c0_9, %c0_10] : memref<288x196xf32, #tpu.memory_space<vmem>>, vector<288x196xf32>
    %13 = arith.addf %11, %12 : vector<288x196xf32>
    %cst_11 = arith.constant 0.000000e+00 : f32
    %14 = vector.broadcast %cst_11 : f32 to vector<288x196xf32>
    %15 = arith.maximumf %13, %14 : vector<288x196xf32>
    %c0_12 = arith.constant 0 : index
    %c0_13 = arith.constant 0 : index
    %16 = vector.load %arg7[%c0_12, %c0_13] : memref<288x196xf32, #tpu.memory_space<vmem>>, vector<288x196xf32>
    tpu.vector_store %arg7[%c0_12, %c0_13], %15 {strides = array<i32>} : memref<288x196xf32, #tpu.memory_space<vmem>>, vector<288x196xf32>,
    return
  }
  func.func @transform_0(%arg0: i32) -> (i32, i32) {
    %c0_i32 = arith.constant 0 : i32
    %c0_i32_0 = arith.constant 0 : i32
    %c0_i32_1 = arith.constant 0 : i32
    return %c0_i32, %c0_i32_0 : i32, i32
  }
  func.func @transform_1(%arg0: i32) -> (i32, i32) {
    %c0_i32 = arith.constant 0 : i32
    %c0_i32_0 = arith.constant 0 : i32
    return %arg0, %c0_i32 : i32, i32
  }
  func.func @transform_2(%arg0: i32) -> (i32, i32) {
    %c0_i32 = arith.constant 0 : i32
    %c0_i32_0 = arith.constant 0 : i32
    %c0_i32_1 = arith.constant 0 : i32
    return %c0_i32, %c0_i32_0 : i32, i32
  }
  func.func @transform_3(%arg0: i32) -> (i32, i32) {
    %c0_i32 = arith.constant 0 : i32
    %c0_i32_0 = arith.constant 0 : i32
    return %arg0, %c0_i32 : i32, i32
  }
  func.func @transform_4(%arg0: i32) -> (i32, i32) {
    %c0_i32 = arith.constant 0 : i32
    %c0_i32_0 = arith.constant 0 : i32
    return %arg0, %c0_i32 : i32, i32
  }
  func.func @transform_5(%arg0: i32) -> (i32, i32) {
    %c0_i32 = arith.constant 0 : i32
    %c0_i32_0 = arith.constant 0 : i32
    return %arg0, %c0_i32 : i32, i32
  }
  func.func @transform_6(%arg0: i32) -> (i32, i32) {
    %c0_i32 = arith.constant 0 : i32
    %c0_i32_0 = arith.constant 0 : i32
    return %arg0, %c0_i32 : i32, i32
  }
}

</mosaic_0001>

<llo_original>
// kernel: tpu_custom_call.1
$region0: #{tpu_custom_call.1}
  #allocation0 [shape = 'u32[]', space=smem, size = 0x4, offset = 0x4, fixed_abs, tag = 'smem constant byte address 0x4 - core index']
  #allocation1 [shape = 'u32[144,128]{1,0:T(1,128)}', space=vmem, size = 0x12000, scoped, tag = 'internal scratch']
  %s0 = inlined_call_operand.vmem [shape: f32[576,196], index: 0, kind: input, shape index: {}]
  %s1 = inlined_call_operand.vmem [shape: f32[576,576], index: 1, kind: input, shape index: {}]
  %s2 = inlined_call_operand.vmem [shape: f32[1,576], index: 2, kind: input, shape index: {}]
  %s3 = inlined_call_operand.vmem [shape: f32[576,1], index: 3, kind: input, shape index: {}]
  %s4 = inlined_call_operand.vmem [shape: f32[576,1], index: 4, kind: input, shape index: {}]
  %s5 = inlined_call_operand.vmem [shape: f32[576,196], index: 5, kind: input, shape index: {}]
  %s6 = inlined_call_operand.vmem [shape: f32[576,196], index: 6, kind: output, shape index: {}]
  %s7 = sld [smem:[#allocation0]]
  $region57: #{tpu_custom_call.1} parent=0
    _
  %s9 = ssub.s32 1, %s7
  %s10 = scalar_select 0, %s9, %s7
  loop: start=0, step=1, limit=4
  $region2: #{tpu_custom_call.1} parent=0 // loop_pre_header
    _
  $region3: #{tpu_custom_call.1} parent=0 // loop_header
    %s12 = sphi 0, %s16
    %p13 = scmp.ge.s32.totalorder %s12, 4
    %s20 = sphi 0, %s20
    %s22 = sphi 0, %s20
    %s23 = sphi 0, %s22
    %s37 = sphi 0, %s23
    %s43 = sphi 0, %s45
    %s46 = sphi 0, %s43
    %s47 = sphi 0, %s46
    %s63 = sphi 0, %s47
    %s67 = sphi 0, %s67
    %s69 = sphi 0, %s67
    %s70 = sphi 0, %s69
    %s84 = sphi 0, %s70
    %s90 = sphi 0, %s92
    %s93 = sphi 0, %s90
    %s94 = sphi 0, %s93
    %s110 = sphi 0, %s94
    %s116 = sphi 0, %s118
    %s119 = sphi 0, %s116
    %s120 = sphi 0, %s119
    %s136 = sphi 0, %s120
    %s142 = sphi 0, %s144
    %s145 = sphi 0, %s142
    %s146 = sphi 0, %s145
    %s162 = sphi 0, %s146
    %s168 = sphi 0, %s170
    %s171 = sphi 0, %s168
    %s172 = sphi 0, %s171
    %s188 = sphi 0, %s172
  $region4: #{tpu_custom_call.1} parent=0 // loop_header_branch
    %15 = sbr.rel (%p13) target = $region8
  $region5: #{tpu_custom_call.1} parent=0 // loop_body
    %s17 = ssub.s32 %s12, 1
    %s18 = ssub.s32 %s12, 2
    %s19 = sadd.s32 %s12, 1
    %s21 = sadd.s32 %s20, 1
    %p24 = scmp.eq.s32.totalorder %s12, 1
    %p25 = scmp.ne.s32.totalorder %s20, %s22
    %p26 = scmp.eq.s32.totalorder %s12, 0
    %p27 = por %p25, %p26
    %p28 = scmp.ne.s32.totalorder %s20, %s22
    %p29 = scmp.eq.s32.totalorder %s17, 1
    %p30 = por %p28, %p29
    %p31 = scmp.ne.s32.totalorder %s22, %s23
    %p32 = scmp.eq.s32.totalorder %s17, 0
    %p33 = por %p31, %p32
    %p34 = scmp.ne.s32.totalorder %s22, %s23
    %p35 = scmp.eq.s32.totalorder %s18, 1
    %p36 = por %p34, %p35
    %p38 = scmp.ne.s32.totalorder %s23, %s37
    %p39 = scmp.eq.s32.totalorder %s18, 0
    %p40 = por %p38, %p39
    %s41 = ssub.s32 %s12, %s19
    %p42 = scmp.eq.s32.totalorder %s41, 0
    %s44 = sadd.s32 %s43, 1
    %s45 = scalar_select %p42, %s43, %s44
    %p48 = pneg %p42
    %p49 = scmp.eq.s32.totalorder %s12, 1
    %p50 = por %p48, %p49
    %p51 = scmp.ne.s32.totalorder %s43, %s46
    %p52 = scmp.eq.s32.totalorder %s12, 0
    %p53 = por %p51, %p52
    %p54 = scmp.ne.s32.totalorder %s43, %s46
    %p55 = scmp.eq.s32.totalorder %s17, 1
    %p56 = por %p54, %p55
    %p57 = scmp.ne.s32.totalorder %s46, %s47
    %p58 = scmp.eq.s32.totalorder %s17, 0
    %p59 = por %p57, %p58
    %p60 = scmp.ne.s32.totalorder %s46, %s47
    %p61 = scmp.eq.s32.totalorder %s18, 1
    %p62 = por %p60, %p61
    %p64 = scmp.ne.s32.totalorder %s47, %s63
    %p65 = scmp.eq.s32.totalorder %s18, 0
    %p66 = por %p64, %p65
    %s68 = sadd.s32 %s67, 1
    %p71 = scmp.eq.s32.totalorder %s12, 1
    %p72 = scmp.ne.s32.totalorder %s67, %s69
    %p73 = scmp.eq.s32.totalorder %s12, 0
    %p74 = por %p72, %p73
    %p75 = scmp.ne.s32.totalorder %s67, %s69
    %p76 = scmp.eq.s32.totalorder %s17, 1
    %p77 = por %p75, %p76
    %p78 = scmp.ne.s32.totalorder %s69, %s70
    %p79 = scmp.eq.s32.totalorder %s17, 0
    %p80 = por %p78, %p79
    %p81 = scmp.ne.s32.totalorder %s69, %s70
    %p82 = scmp.eq.s32.totalorder %s18, 1
    %p83 = por %p81, %p82
    %p85 = scmp.ne.s32.totalorder %s70, %s84
    %p86 = scmp.eq.s32.totalorder %s18, 0
    %p87 = por %p85, %p86
    %s88 = ssub.s32 %s12, %s19
    %p89 = scmp.eq.s32.totalorder %s88, 0
    %s91 = sadd.s32 %s90, 1
    %s92 = scalar_select %p89, %s90, %s91
    %p95 = pneg %p89
    %p96 = scmp.eq.s32.totalorder %s12, 1
    %p97 = por %p95, %p96
    %p98 = scmp.ne.s32.totalorder %s90, %s93
    %p99 = scmp.eq.s32.totalorder %s12, 0
    %p100 = por %p98, %p99
    %p101 = scmp.ne.s32.totalorder %s90, %s93
    %p102 = scmp.eq.s32.totalorder %s17, 1
    %p103 = por %p101, %p102
    %p104 = scmp.ne.s32.totalorder %s93, %s94
    %p105 = scmp.eq.s32.totalorder %s17, 0
    %p106 = por %p104, %p105
    %p107 = scmp.ne.s32.totalorder %s93, %s94
    %p108 = scmp.eq.s32.totalorder %s18, 1
    %p109 = por %p107, %p108
    %p111 = scmp.ne.s32.totalorder %s94, %s110
    %p112 = scmp.eq.s32.totalorder %s18, 0
    %p113 = por %p111, %p112
    %s114 = ssub.s32 %s12, %s19
    %p115 = scmp.eq.s32.totalorder %s114, 0
    %s117 = sadd.s32 %s116, 1
    %s118 = scalar_select %p115, %s116, %s117
    %p121 = pneg %p115
    %p122 = scmp.eq.s32.totalorder %s12, 1
    %p123 = por %p121, %p122
    %p124 = scmp.ne.s32.totalorder %s116, %s119
    %p125 = scmp.eq.s32.totalorder %s12, 0
    %p126 = por %p124, %p125
    %p127 = scmp.ne.s32.totalorder %s116, %s119
    %p128 = scmp.eq.s32.totalorder %s17, 1
    %p129 = por %p127, %p128
    %p130 = scmp.ne.s32.totalorder %s119, %s120
    %p131 = scmp.eq.s32.totalorder %s17, 0
    %p132 = por %p130, %p131
    %p133 = scmp.ne.s32.totalorder %s119, %s120
    %p134 = scmp.eq.s32.totalorder %s18, 1
    %p135 = por %p133, %p134
    %p137 = scmp.ne.s32.totalorder %s120, %s136
    %p138 = scmp.eq.s32.totalorder %s18, 0
    %p139 = por %p137, %p138
    %s140 = ssub.s32 %s12, %s19
    %p141 = scmp.eq.s32.totalorder %s140, 0
    %s143 = sadd.s32 %s142, 1
    %s144 = scalar_select %p141, %s142, %s143
    %p147 = pneg %p141
    %p148 = scmp.eq.s32.totalorder %s12, 1
    %p149 = por %p147, %p148
    %p150 = scmp.ne.s32.totalorder %s142, %s145
    %p151 = scmp.eq.s32.totalorder %s12, 0
    %p152 = por %p150, %p151
    %p153 = scmp.ne.s32.totalorder %s142, %s145
    %p154 = scmp.eq.s32.totalorder %s17, 1
    %p155 = por %p153, %p154
    %p156 = scmp.ne.s32.totalorder %s145, %s146
    %p157 = scmp.eq.s32.totalorder %s17, 0
    %p158 = por %p156, %p157
    %p159 = scmp.ne.s32.totalorder %s145, %s146
    %p160 = scmp.eq.s32.totalorder %s18, 1
    %p161 = por %p159, %p160
    %p163 = scmp.ne.s32.totalorder %s146, %s162
    %p164 = scmp.eq.s32.totalorder %s18, 0
    %p165 = por %p163, %p164
    %s166 = ssub.s32 %s12, %s19
    %p167 = scmp.eq.s32.totalorder %s166, 0
    %s169 = sadd.s32 %s168, 1
    %s170 = scalar_select %p167, %s168, %s169
    %p173 = pneg %p167
    %p174 = scmp.eq.s32.totalorder %s12, 1
    %p175 = por %p173, %p174
    %p176 = scmp.ne.s32.totalorder %s168, %s171
    %p177 = scmp.eq.s32.totalorder %s12, 0
    %p178 = por %p176, %p177
    %p179 = scmp.ne.s32.totalorder %s168, %s171
    %p180 = scmp.eq.s32.totalorder %s17, 1
    %p181 = por %p179, %p180
    %p182 = scmp.ne.s32.totalorder %s171, %s172
    %p183 = scmp.eq.s32.totalorder %s17, 0
    %p184 = por %p182, %p183
    %p185 = scmp.ne.s32.totalorder %s171, %s172
    %p186 = scmp.eq.s32.totalorder %s18, 1
    %p187 = por %p185, %p186
    %p189 = scmp.ne.s32.totalorder %s172, %s188
    %p190 = scmp.eq.s32.totalorder %s18, 0
    %p191 = por %p189, %p190
    %p192 = scmp.le.s32.totalorder 1, %s12
    %p193 = scmp.lt.s32.totalorder %s12, 3
    %p194 = pnand %p192, %p193
    %p195 = pneg %p194
    // Predicated region
    $region9: #{tpu_custom_call.1} parent=5 // pred_check
      _
    $region10: #{tpu_custom_call.1} parent=5 // pred_check_branch
      %197 = sbr.rel (%p194) target = $region12
    $region11: #{tpu_custom_call.1} parent=5 // pred_region
      %s198 = ssub.s32 %s12, 1
      // Predicated region
      $region13: #{tpu_custom_call.1} parent=11 // pred_check
        %p199 = pneg %p33
      $region14: #{tpu_custom_call.1} parent=11 // pred_check_branch
        %201 = sbr.rel (%p199) target = $region16
      $region15: #{tpu_custom_call.1} parent=11 // pred_region
        _
      $region16: #{tpu_custom_call.1} parent=11 // pred_fallthru
        _
      // Predicated region
      $region17: #{tpu_custom_call.1} parent=11 // pred_check
        %p202 = pneg %p80
      $region18: #{tpu_custom_call.1} parent=11 // pred_check_branch
        %204 = sbr.rel (%p202) target = $region20
      $region19: #{tpu_custom_call.1} parent=11 // pred_region
        _
      $region20: #{tpu_custom_call.1} parent=11 // pred_fallthru
        _
    $region12: #{tpu_custom_call.1} parent=5 // pred_fallthru
      _
    %p205 = scmp.lt.s32.totalorder %s12, 2
    // Predicated region
    $region21: #{tpu_custom_call.1} parent=5 // pred_check
      %p206 = pneg %p205
    $region22: #{tpu_custom_call.1} parent=5 // pred_check_branch
      %208 = sbr.rel (%p206) target = $region24
    $region23: #{tpu_custom_call.1} parent=5 // pred_region
      // Predicated region
      $region25: #{tpu_custom_call.1} parent=23 // pred_check
        %p209 = pneg %p53
      $region26: #{tpu_custom_call.1} parent=23 // pred_check_branch
        %211 = sbr.rel (%p209) target = $region28
      $region27: #{tpu_custom_call.1} parent=23 // pred_region
        %s212 = smul.u32 36, %s12
        %p213 = scmp.lt.s32.totalorder %s212, 71
        %s214 = scalar_select %p213, %s212, 71
        %s215 = smul.addr %s214, 5
        %s216 = smul.addr %s215, 8
        %s217 = scalar_lea.vmem %s1, %s216
        %s218 = smul.u32 36, %s12
      $region28: #{tpu_custom_call.1} parent=23 // pred_fallthru
        _
      // Predicated region
      $region29: #{tpu_custom_call.1} parent=23 // pred_check
        %p219 = pneg %p100
      $region30: #{tpu_custom_call.1} parent=23 // pred_check_branch
        %221 = sbr.rel (%p219) target = $region32
      $region31: #{tpu_custom_call.1} parent=23 // pred_region
        %s222 = smul.u32 36, %s12
        %p223 = scmp.lt.s32.totalorder %s222, 71
        %s224 = scalar_select %p223, %s222, 71
        %s225 = smul.addr %s224, 8
        %s226 = scalar_lea.vmem %s3, %s225
        %s227 = smul.u32 36, %s12
      $region32: #{tpu_custom_call.1} parent=23 // pred_fallthru
        _
      // Predicated region
      $region33: #{tpu_custom_call.1} parent=23 // pred_check
        %p228 = pneg %p126
      $region34: #{tpu_custom_call.1} parent=23 // pred_check_branch
        %230 = sbr.rel (%p228) target = $region36
      $region35: #{tpu_custom_call.1} parent=23 // pred_region
        %s231 = smul.u32 36, %s12
        %p232 = scmp.lt.s32.totalorder %s231, 71
        %s233 = scalar_select %p232, %s231, 71
        %s234 = smul.addr %s233, 8
        %s235 = scalar_lea.vmem %s4, %s234
        %s236 = smul.u32 36, %s12
      $region36: #{tpu_custom_call.1} parent=23 // pred_fallthru
        _
      // Predicated region
      $region37: #{tpu_custom_call.1} parent=23 // pred_check
        %p237 = pneg %p152
      $region38: #{tpu_custom_call.1} parent=23 // pred_check_branch
        %239 = sbr.rel (%p237) target = $region40
      $region39: #{tpu_custom_call.1} parent=23 // pred_region
        %s240 = smul.u32 36, %s12
        %p241 = scmp.lt.s32.totalorder %s240, 71
        %s242 = scalar_select %p241, %s240, 71
        %s243 = smul.addr %s242, 2
        %s244 = smul.addr %s243, 8
        %s245 = scalar_lea.vmem %s5, %s244
        %s246 = smul.u32 36, %s12
      $region40: #{tpu_custom_call.1} parent=23 // pred_fallthru
        _
    $region24: #{tpu_custom_call.1} parent=5 // pred_fallthru
      _
    %p247 = scmp.le.s32.totalorder 1, %s12
    %p248 = scmp.lt.s32.totalorder %s12, 3
    %p249 = pnand %p247, %p248
    %p250 = pneg %p249
    // Predicated region
    $region41: #{tpu_custom_call.1} parent=5 // pred_check
      _
    $region42: #{tpu_custom_call.1} parent=5 // pred_check_branch
      %252 = sbr.rel (%p249) target = $region44
    $region43: #{tpu_custom_call.1} parent=5 // pred_region
      %s253 = ssub.s32 %s12, 1
      %p254 = pneg %p33
      %p255 = pneg %p30
      %s256 = smul.u32 36, %s17
      %p257 = scmp.lt.s32.totalorder %s256, 71
      %s258 = scalar_select %p257, %s256, 71
      %s259 = smul.addr %s258, 5
      %s260 = smul.addr %s259, 8
      %s261 = scalar_lea.vmem %s1, %s260
      %p262 = pneg %p59
      %p263 = pneg %p56
      %p264 = pneg %p80
      %p265 = pneg %p77
      %s266 = smul.u32 36, %s17
      %p267 = scmp.lt.s32.totalorder %s266, 71
      %s268 = scalar_select %p267, %s266, 71
      %s269 = smul.addr %s268, 8
      %s270 = scalar_lea.vmem %s3, %s269
      %p271 = pneg %p106
      %p272 = pneg %p103
      %s273 = smul.u32 36, %s17
      %p274 = scmp.lt.s32.totalorder %s273, 71
      %s275 = scalar_select %p274, %s273, 71
      %s276 = smul.addr %s275, 8
      %s277 = scalar_lea.vmem %s4, %s276
      %p278 = pneg %p132
      %p279 = pneg %p129
      %s280 = smul.u32 36, %s17
      %p281 = scmp.lt.s32.totalorder %s280, 71
      %s282 = scalar_select %p281, %s280, 71
      %s283 = smul.addr %s282, 2
      %s284 = smul.addr %s283, 8
      %s285 = scalar_lea.vmem %s5, %s284
      %p286 = pneg %p158
      %p287 = pneg %p155
      %p288 = pneg %p184
      %p289 = pneg %p181
      %s290 = smul.u32 36, %s17
      %p291 = scmp.lt.s32.totalorder %s290, 71
      %s292 = scalar_select %p291, %s290, 71
      %s293 = smul.addr %s292, 2
      %s294 = smul.addr %s293, 8
      %s295 = scalar_lea.vmem %s6, %s294
      %s296 = smul.u32 36, %s17
      %p297 = scmp.lt.s32.totalorder %s296, 71
      %s298 = scalar_select %p297, %s296, 71
      %s299 = smul.addr %s298, 5
      %s300 = smul.addr %s299, 8
      %s301 = scalar_lea.vmem %s1, %s300
      %s302 = smul.u32 36, %s17
      %s303 = smul.u32 36, %s17
      %p304 = scmp.lt.s32.totalorder %s303, 71
      %s305 = scalar_select %p304, %s303, 71
      %s306 = smul.addr %s305, 8
      %s307 = scalar_lea.vmem %s3, %s306
      %s308 = smul.u32 36, %s17
      %s309 = smul.u32 36, %s17
      %p310 = scmp.lt.s32.totalorder %s309, 71
      %s311 = scalar_select %p310, %s309, 71
      %s312 = smul.addr %s311, 8
      %s313 = scalar_lea.vmem %s4, %s312
      %s314 = smul.u32 36, %s17
      %s315 = smul.u32 36, %s17
      %p316 = scmp.lt.s32.totalorder %s315, 71
      %s317 = scalar_select %p316, %s315, 71
      %s318 = smul.addr %s317, 2
      %s319 = smul.addr %s318, 8
      %s320 = scalar_lea.vmem %s5, %s319
      %s321 = smul.u32 36, %s17
      %s322 = smul.u32 36, %s17
      %p323 = scmp.lt.s32.totalorder %s322, 71
      %s324 = scalar_select %p323, %s322, 71
      %s325 = smul.addr %s324, 2
      %s326 = smul.addr %s325, 8
      %s327 = scalar_lea.vmem %s6, %s326
      %s328 = smul.u32 36, %s17
      %v329 = vld [vmem:[%s301] sm:$0xff]
      %v330 = vld [vmem:[%s301 + $0x8] sm:$0xff]
      %v331 = vld [vmem:[%s301 + $0x10] sm:$0xff]
      %v332 = vld [vmem:[%s301 + $0x18] sm:$0xff]
      %v333 = vld [vmem:[%s301 + $0x20] sm:$0xff]
      %v334 = vld [vmem:[%s301 + $0x28] sm:$0xff]
      %v335 = vld [vmem:[%s301 + $0x30] sm:$0xff]
      %v336 = vld [vmem:[%s301 + $0x38] sm:$0xff]
      %v337 = vld [vmem:[%s301 + $0x40] sm:$0xff]
      %v338 = vld [vmem:[%s301 + $0x48] sm:$0xff]
      %v339 = vld [vmem:[%s301 + $0x50] sm:$0xff]
      %v340 = vld [vmem:[%s301 + $0x58] sm:$0xff]
      %v341 = vld [vmem:[%s301 + $0x60] sm:$0xff]
      %v342 = vld [vmem:[%s301 + $0x68] sm:$0xff]
      %v343 = vld [vmem:[%s301 + $0x70] sm:$0xff]
      %v344 = vld [vmem:[%s301 + $0x78] sm:$0xff]
      %v345 = vld [vmem:[%s301 + $0x80] sm:$0xff]
      %v346 = vld [vmem:[%s301 + $0x88] sm:$0xff]
      %v347 = vld [vmem:[%s301 + $0x90] sm:$0xff]
      %v348 = vld [vmem:[%s301 + $0x98] sm:$0xff]
      %v349 = vld [vmem:[%s301 + $0xa0] sm:$0xff]
      %v350 = vld [vmem:[%s301 + $0xa8] sm:$0xff]
      %v351 = vld [vmem:[%s301 + $0xb0] sm:$0xff]
      %v352 = vld [vmem:[%s301 + $0xb8] sm:$0xff]
      %v353 = vld [vmem:[%s301 + $0xc0] sm:$0xff]
      %v354 = vld [vmem:[%s301 + $0xc8] sm:$0xff]
      %v355 = vld [vmem:[%s301 + $0xd0] sm:$0xff]
      %v356 = vld [vmem:[%s301 + $0xd8] sm:$0xff]
      %v357 = vld [vmem:[%s301 + $0xe0] sm:$0xff]
      %v358 = vld [vmem:[%s301 + $0xe8] sm:$0xff]
      %v359 = vld [vmem:[%s301 + $0xf0] sm:$0xff]
      %v360 = vld [vmem:[%s301 + $0xf8] sm:$0xff]
      %v361 = vld [vmem:[%s301 + $0x100] sm:$0xff]
      %v362 = vld [vmem:[%s301 + $0x108] sm:$0xff]
      %v363 = vld [vmem:[%s301 + $0x110] sm:$0xff]
      %v364 = vld [vmem:[%s301 + $0x118] sm:$0xff]
      %v365 = vld [vmem:[%s301 + $0x120] sm:$0xff]
      %v366 = vld [vmem:[%s301 + $0x128] sm:$0xff]
      %v367 = vld [vmem:[%s301 + $0x130] sm:$0xff]
      %v368 = vld [vmem:[%s301 + $0x138] sm:$0xff]
      %v369 = vld [vmem:[%s301 + $0x140] sm:$0xff]
      %v370 = vld [vmem:[%s301 + $0x148] sm:$0xff]
      %v371 = vld [vmem:[%s301 + $0x150] sm:$0xff]
      %v372 = vld [vmem:[%s301 + $0x158] sm:$0xff]
      %v373 = vld [vmem:[%s301 + $0x160] sm:$0xff]
      %v374 = vld [vmem:[%s301 + $0x168] sm:$0xff]
      %v375 = vld [vmem:[%s301 + $0x170] sm:$0xff]
      %v376 = vld [vmem:[%s301 + $0x178] sm:$0xff]
      %v377 = vld [vmem:[%s301 + $0x180] sm:$0xff]
      %v378 = vld [vmem:[%s301 + $0x188] sm:$0xff]
      %v379 = vld [vmem:[%s301 + $0x190] sm:$0xff]
      %v380 = vld [vmem:[%s301 + $0x198] sm:$0xff]
      %v381 = vld [vmem:[%s301 + $0x1a0] sm:$0xff]
      %v382 = vld [vmem:[%s301 + $0x1a8] sm:$0xff]
      %v383 = vld [vmem:[%s301 + $0x1b0] sm:$0xff]
      %v384 = vld [vmem:[%s301 + $0x1b8] sm:$0xff]
      %v385 = vld [vmem:[%s301 + $0x1c0] sm:$0xff]
      %v386 = vld [vmem:[%s301 + $0x1c8] sm:$0xff]
      %v387 = vld [vmem:[%s301 + $0x1d0] sm:$0xff]
      %v388 = vld [vmem:[%s301 + $0x1d8] sm:$0xff]
      %v389 = vld [vmem:[%s301 + $0x1e0] sm:$0xff]
      %v390 = vld [vmem:[%s301 + $0x1e8] sm:$0xff]
      %v391 = vld [vmem:[%s301 + $0x1f0] sm:$0xff]
      %v392 = vld [vmem:[%s301 + $0x1f8] sm:$0xff]
      %v393 = vld [vmem:[%s301 + $0x200] sm:$0xff]
      %v394 = vld [vmem:[%s301 + $0x208] sm:$0xff]
      %v395 = vld [vmem:[%s301 + $0x210] sm:$0xff]
      %v396 = vld [vmem:[%s301 + $0x218] sm:$0xff]
      %v397 = vld [vmem:[%s301 + $0x220] sm:$0xff]
      %v398 = vld [vmem:[%s301 + $0x228] sm:$0xff]
      %v399 = vld [vmem:[%s301 + $0x230] sm:$0xff]
      %v400 = vld [vmem:[%s301 + $0x238] sm:$0xff]
      %v401 = vld [vmem:[%s301 + $0x240] sm:$0xff]
      %v402 = vld [vmem:[%s301 + $0x248] sm:$0xff]
      %v403 = vld [vmem:[%s301 + $0x250] sm:$0xff]
      %v404 = vld [vmem:[%s301 + $0x258] sm:$0xff]
      %v405 = vld [vmem:[%s301 + $0x260] sm:$0xff]
      %v406 = vld [vmem:[%s301 + $0x268] sm:$0xff]
      %v407 = vld [vmem:[%s301 + $0x270] sm:$0xff]
      %v408 = vld [vmem:[%s301 + $0x278] sm:$0xff]
      %v409 = vld [vmem:[%s301 + $0x280] sm:$0xff]
      %v410 = vld [vmem:[%s301 + $0x288] sm:$0xff]
      %v411 = vld [vmem:[%s301 + $0x290] sm:$0xff]
      %v412 = vld [vmem:[%s301 + $0x298] sm:$0xff]
      %v413 = vld [vmem:[%s301 + $0x2a0] sm:$0xff]
      %v414 = vld [vmem:[%s301 + $0x2a8] sm:$0xff]
      %v415 = vld [vmem:[%s301 + $0x2b0] sm:$0xff]
      %v416 = vld [vmem:[%s301 + $0x2b8] sm:$0xff]
      %v417 = vld [vmem:[%s301 + $0x2c0] sm:$0xff]
      %v418 = vld [vmem:[%s301 + $0x2c8] sm:$0xff]
      %v419 = vld [vmem:[%s301 + $0x2d0] sm:$0xff]
      %v420 = vld [vmem:[%s301 + $0x2d8] sm:$0xff]
      %v421 = vld [vmem:[%s301 + $0x2e0] sm:$0xff]
      %v422 = vld [vmem:[%s301 + $0x2e8] sm:$0xff]
      %v423 = vld [vmem:[%s301 + $0x2f0] sm:$0xff]
      %v424 = vld [vmem:[%s301 + $0x2f8] sm:$0xff]
      %v425 = vld [vmem:[%s301 + $0x300] sm:$0xff]
      %v426 = vld [vmem:[%s301 + $0x308] sm:$0xff]
      %v427 = vld [vmem:[%s301 + $0x310] sm:$0xff]
      %v428 = vld [vmem:[%s301 + $0x318] sm:$0xff]
      %v429 = vld [vmem:[%s301 + $0x320] sm:$0xff]
      %v430 = vld [vmem:[%s301 + $0x328] sm:$0xff]
      %v431 = vld [vmem:[%s301 + $0x330] sm:$0xff]
      %v432 = vld [vmem:[%s301 + $0x338] sm:$0xff]
      %v433 = vld [vmem:[%s301 + $0x340] sm:$0xff]
      %v434 = vld [vmem:[%s301 + $0x348] sm:$0xff]
      %v435 = vld [vmem:[%s301 + $0x350] sm:$0xff]
      %v436 = vld [vmem:[%s301 + $0x358] sm:$0xff]
      %v437 = vld [vmem:[%s301 + $0x360] sm:$0xff]
      %v438 = vld [vmem:[%s301 + $0x368] sm:$0xff]
      %v439 = vld [vmem:[%s301 + $0x370] sm:$0xff]
      %v440 = vld [vmem:[%s301 + $0x378] sm:$0xff]
      %v441 = vld [vmem:[%s301 + $0x380] sm:$0xff]
      %v442 = vld [vmem:[%s301 + $0x388] sm:$0xff]
      %v443 = vld [vmem:[%s301 + $0x390] sm:$0xff]
      %v444 = vld [vmem:[%s301 + $0x398] sm:$0xff]
      %v445 = vld [vmem:[%s301 + $0x3a0] sm:$0xff]
      %v446 = vld [vmem:[%s301 + $0x3a8] sm:$0xff]
      %v447 = vld [vmem:[%s301 + $0x3b0] sm:$0xff]
      %v448 = vld [vmem:[%s301 + $0x3b8] sm:$0xff]
      %v449 = vld [vmem:[%s301 + $0x3c0] sm:$0xff]
      %v450 = vld [vmem:[%s301 + $0x3c8] sm:$0xff]
      %v451 = vld [vmem:[%s301 + $0x3d0] sm:$0xff]
      %v452 = vld [vmem:[%s301 + $0x3d8] sm:$0xff]
      %v453 = vld [vmem:[%s301 + $0x3e0] sm:$0xff]
      %v454 = vld [vmem:[%s301 + $0x3e8] sm:$0xff]
      %v455 = vld [vmem:[%s301 + $0x3f0] sm:$0xff]
      %v456 = vld [vmem:[%s301 + $0x3f8] sm:$0xff]
      %v457 = vld [vmem:[%s301 + $0x400] sm:$0xff]
      %v458 = vld [vmem:[%s301 + $0x408] sm:$0xff]
      %v459 = vld [vmem:[%s301 + $0x410] sm:$0xff]
      %v460 = vld [vmem:[%s301 + $0x418] sm:$0xff]
      %v461 = vld [vmem:[%s301 + $0x420] sm:$0xff]
      %v462 = vld [vmem:[%s301 + $0x428] sm:$0xff]
      %v463 = vld [vmem:[%s301 + $0x430] sm:$0xff]
      %v464 = vld [vmem:[%s301 + $0x438] sm:$0xff]
      %v465 = vld [vmem:[%s301 + $0x440] sm:$0xff]
      %v466 = vld [vmem:[%s301 + $0x448] sm:$0xff]
      %v467 = vld [vmem:[%s301 + $0x450] sm:$0xff]
      %v468 = vld [vmem:[%s301 + $0x458] sm:$0xff]
      %v469 = vld [vmem:[%s301 + $0x460] sm:$0xff]
      %v470 = vld [vmem:[%s301 + $0x468] sm:$0xff]
      %v471 = vld [vmem:[%s301 + $0x470] sm:$0xff]
      %v472 = vld [vmem:[%s301 + $0x478] sm:$0xff]
      %v473 = vld [vmem:[%s301 + $0x480] sm:$0xff]
      %v474 = vld [vmem:[%s301 + $0x488] sm:$0xff]
      %v475 = vld [vmem:[%s301 + $0x490] sm:$0xff]
      %v476 = vld [vmem:[%s301 + $0x498] sm:$0xff]
      %v477 = vld [vmem:[%s301 + $0x4a0] sm:$0xff]
      %v478 = vld [vmem:[%s301 + $0x4a8] sm:$0xff]
      %v479 = vld [vmem:[%s301 + $0x4b0] sm:$0xff]
      %v480 = vld [vmem:[%s301 + $0x4b8] sm:$0xff]
      %v481 = vld [vmem:[%s301 + $0x4c0] sm:$0xff]
      %v482 = vld [vmem:[%s301 + $0x4c8] sm:$0xff]
      %v483 = vld [vmem:[%s301 + $0x4d0] sm:$0xff]
      %v484 = vld [vmem:[%s301 + $0x4d8] sm:$0xff]
      %v485 = vld [vmem:[%s301 + $0x4e0] sm:$0xff]
      %v486 = vld [vmem:[%s301 + $0x4e8] sm:$0xff]
      %v487 = vld [vmem:[%s301 + $0x4f0] sm:$0xff]
      %v488 = vld [vmem:[%s301 + $0x4f8] sm:$0xff]
      %v489 = vld [vmem:[%s301 + $0x500] sm:$0xff]
      %v490 = vld [vmem:[%s301 + $0x508] sm:$0xff]
      %v491 = vld [vmem:[%s301 + $0x510] sm:$0xff]
      %v492 = vld [vmem:[%s301 + $0x518] sm:$0xff]
      %v493 = vld [vmem:[%s301 + $0x520] sm:$0xff]
      %v494 = vld [vmem:[%s301 + $0x528] sm:$0xff]
      %v495 = vld [vmem:[%s301 + $0x530] sm:$0xff]
      %v496 = vld [vmem:[%s301 + $0x538] sm:$0xff]
      %v497 = vld [vmem:[%s301 + $0x540] sm:$0xff]
      %v498 = vld [vmem:[%s301 + $0x548] sm:$0xff]
      %v499 = vld [vmem:[%s301 + $0x550] sm:$0xff]
      %v500 = vld [vmem:[%s301 + $0x558] sm:$0xff]
      %v501 = vld [vmem:[%s301 + $0x560] sm:$0xff]
      %v502 = vld [vmem:[%s301 + $0x568] sm:$0xff]
      %v503 = vld [vmem:[%s301 + $0x570] sm:$0xff]
      %v504 = vld [vmem:[%s301 + $0x578] sm:$0xff]
      %v505 = vld [vmem:[%s301 + $0x580] sm:$0xff]
      %v506 = vld [vmem:[%s301 + $0x588] sm:$0xff]
      %v507 = vld [vmem:[%s301 + $0x590] sm:$0xff]
      %v508 = vld [vmem:[%s301 + $0x598] sm:$0xff]
      %v509 = vld [vmem:[%s2] sm:$0x1f]
      %v511 = vlaneseq
      %v512 = vshrl.u32 %v511, 7
      %v513 = vsub.s32 0, %v512
      %v514 = vrot.slane %v509, %v513
      %v515 = vlaneseq
      %v516 = vshrl.u32 %v515, 7
      %v517 = vsub.s32 1, %v516
      %v518 = vrot.slane %v509, %v517
      %v519 = vlaneseq
      %v520 = vshrl.u32 %v519, 7
      %v521 = vsub.s32 2, %v520
      %v522 = vrot.slane %v509, %v521
      %v523 = vlaneseq
      %v524 = vshrl.u32 %v523, 7
      %v525 = vsub.s32 3, %v524
      %v526 = vrot.slane %v509, %v525
      %v527 = vlaneseq
      %v528 = vshrl.u32 %v527, 7
      %v529 = vsub.s32 4, %v528
      %v530 = vrot.slane %v509, %v529
      %v536 = vmul.f32 %v329, %v514
      %v537 = vmul.f32 %v330, %v518
      %v538 = vmul.f32 %v331, %v522
      %v539 = vmul.f32 %v332, %v526
      %v540 = vmul.f32 %v333, %v530
      %v541 = vmul.f32 %v334, %v514
      %v542 = vmul.f32 %v335, %v518
      %v543 = vmul.f32 %v336, %v522
      %v544 = vmul.f32 %v337, %v526
      %v545 = vmul.f32 %v338, %v530
      %v546 = vmul.f32 %v339, %v514
      %v547 = vmul.f32 %v340, %v518
      %v548 = vmul.f32 %v341, %v522
      %v549 = vmul.f32 %v342, %v526
      %v550 = vmul.f32 %v343, %v530
      %v551 = vmul.f32 %v344, %v514
      %v552 = vmul.f32 %v345, %v518
      %v553 = vmul.f32 %v346, %v522
      %v554 = vmul.f32 %v347, %v526
      %v555 = vmul.f32 %v348, %v530
      %v556 = vmul.f32 %v349, %v514
      %v557 = vmul.f32 %v350, %v518
      %v558 = vmul.f32 %v351, %v522
      %v559 = vmul.f32 %v352, %v526
      %v560 = vmul.f32 %v353, %v530
      %v561 = vmul.f32 %v354, %v514
      %v562 = vmul.f32 %v355, %v518
      %v563 = vmul.f32 %v356, %v522
      %v564 = vmul.f32 %v357, %v526
      %v565 = vmul.f32 %v358, %v530
      %v566 = vmul.f32 %v359, %v514
      %v567 = vmul.f32 %v360, %v518
      %v568 = vmul.f32 %v361, %v522
      %v569 = vmul.f32 %v362, %v526
      %v570 = vmul.f32 %v363, %v530
      %v571 = vmul.f32 %v364, %v514
      %v572 = vmul.f32 %v365, %v518
      %v573 = vmul.f32 %v366, %v522
      %v574 = vmul.f32 %v367, %v526
      %v575 = vmul.f32 %v368, %v530
      %v576 = vmul.f32 %v369, %v514
      %v577 = vmul.f32 %v370, %v518
      %v578 = vmul.f32 %v371, %v522
      %v579 = vmul.f32 %v372, %v526
      %v580 = vmul.f32 %v373, %v530
      %v581 = vmul.f32 %v374, %v514
      %v582 = vmul.f32 %v375, %v518
      %v583 = vmul.f32 %v376, %v522
      %v584 = vmul.f32 %v377, %v526
      %v585 = vmul.f32 %v378, %v530
      %v586 = vmul.f32 %v379, %v514
      %v587 = vmul.f32 %v380, %v518
      %v588 = vmul.f32 %v381, %v522
      %v589 = vmul.f32 %v382, %v526
      %v590 = vmul.f32 %v383, %v530
      %v591 = vmul.f32 %v384, %v514
      %v592 = vmul.f32 %v385, %v518
      %v593 = vmul.f32 %v386, %v522
      %v594 = vmul.f32 %v387, %v526
      %v595 = vmul.f32 %v388, %v530
      %v596 = vmul.f32 %v389, %v514
      %v597 = vmul.f32 %v390, %v518
      %v598 = vmul.f32 %v391, %v522
      %v599 = vmul.f32 %v392, %v526
      %v600 = vmul.f32 %v393, %v530
      %v601 = vmul.f32 %v394, %v514
      %v602 = vmul.f32 %v395, %v518
      %v603 = vmul.f32 %v396, %v522
      %v604 = vmul.f32 %v397, %v526
      %v605 = vmul.f32 %v398, %v530
      %v606 = vmul.f32 %v399, %v514
      %v607 = vmul.f32 %v400, %v518
      %v608 = vmul.f32 %v401, %v522
      %v609 = vmul.f32 %v402, %v526
      %v610 = vmul.f32 %v403, %v530
      %v611 = vmul.f32 %v404, %v514
      %v612 = vmul.f32 %v405, %v518
      %v613 = vmul.f32 %v406, %v522
      %v614 = vmul.f32 %v407, %v526
      %v615 = vmul.f32 %v408, %v530
      %v616 = vmul.f32 %v409, %v514
      %v617 = vmul.f32 %v410, %v518
      %v618 = vmul.f32 %v411, %v522
      %v619 = vmul.f32 %v412, %v526
      %v620 = vmul.f32 %v413, %v530
      %v621 = vmul.f32 %v414, %v514
      %v622 = vmul.f32 %v415, %v518
      %v623 = vmul.f32 %v416, %v522
      %v624 = vmul.f32 %v417, %v526
      %v625 = vmul.f32 %v418, %v530
      %v626 = vmul.f32 %v419, %v514
      %v627 = vmul.f32 %v420, %v518
      %v628 = vmul.f32 %v421, %v522
      %v629 = vmul.f32 %v422, %v526
      %v630 = vmul.f32 %v423, %v530
      %v631 = vmul.f32 %v424, %v514
      %v632 = vmul.f32 %v425, %v518
      %v633 = vmul.f32 %v426, %v522
      %v634 = vmul.f32 %v427, %v526
      %v635 = vmul.f32 %v428, %v530
      %v636 = vmul.f32 %v429, %v514
      %v637 = vmul.f32 %v430, %v518
      %v638 = vmul.f32 %v431, %v522
      %v639 = vmul.f32 %v432, %v526
      %v640 = vmul.f32 %v433, %v530
      %v641 = vmul.f32 %v434, %v514
      %v642 = vmul.f32 %v435, %v518
      %v643 = vmul.f32 %v436, %v522
      %v644 = vmul.f32 %v437, %v526
      %v645 = vmul.f32 %v438, %v530
      %v646 = vmul.f32 %v439, %v514
      %v647 = vmul.f32 %v440, %v518
      %v648 = vmul.f32 %v441, %v522
      %v649 = vmul.f32 %v442, %v526
      %v650 = vmul.f32 %v443, %v530
      %v651 = vmul.f32 %v444, %v514
      %v652 = vmul.f32 %v445, %v518
      %v653 = vmul.f32 %v446, %v522
      %v654 = vmul.f32 %v447, %v526
      %v655 = vmul.f32 %v448, %v530
      %v656 = vmul.f32 %v449, %v514
      %v657 = vmul.f32 %v450, %v518
      %v658 = vmul.f32 %v451, %v522
      %v659 = vmul.f32 %v452, %v526
      %v660 = vmul.f32 %v453, %v530
      %v661 = vmul.f32 %v454, %v514
      %v662 = vmul.f32 %v455, %v518
      %v663 = vmul.f32 %v456, %v522
      %v664 = vmul.f32 %v457, %v526
      %v665 = vmul.f32 %v458, %v530
      %v666 = vmul.f32 %v459, %v514
      %v667 = vmul.f32 %v460, %v518
      %v668 = vmul.f32 %v461, %v522
      %v669 = vmul.f32 %v462, %v526
      %v670 = vmul.f32 %v463, %v530
      %v671 = vmul.f32 %v464, %v514
      %v672 = vmul.f32 %v465, %v518
      %v673 = vmul.f32 %v466, %v522
      %v674 = vmul.f32 %v467, %v526
      %v675 = vmul.f32 %v468, %v530
      %v676 = vmul.f32 %v469, %v514
      %v677 = vmul.f32 %v470, %v518
      %v678 = vmul.f32 %v471, %v522
      %v679 = vmul.f32 %v472, %v526
      %v680 = vmul.f32 %v473, %v530
      %v681 = vmul.f32 %v474, %v514
      %v682 = vmul.f32 %v475, %v518
      %v683 = vmul.f32 %v476, %v522
      %v684 = vmul.f32 %v477, %v526
      %v685 = vmul.f32 %v478, %v530
      %v686 = vmul.f32 %v479, %v514
      %v687 = vmul.f32 %v480, %v518
      %v688 = vmul.f32 %v481, %v522
      %v689 = vmul.f32 %v482, %v526
      %v690 = vmul.f32 %v483, %v530
      %v691 = vmul.f32 %v484, %v514
      %v692 = vmul.f32 %v485, %v518
      %v693 = vmul.f32 %v486, %v522
      %v694 = vmul.f32 %v487, %v526
      %v695 = vmul.f32 %v488, %v530
      %v696 = vmul.f32 %v489, %v514
      %v697 = vmul.f32 %v490, %v518
      %v698 = vmul.f32 %v491, %v522
      %v699 = vmul.f32 %v492, %v526
      %v700 = vmul.f32 %v493, %v530
      %v701 = vmul.f32 %v494, %v514
      %v702 = vmul.f32 %v495, %v518
      %v703 = vmul.f32 %v496, %v522
      %v704 = vmul.f32 %v497, %v526
      %v705 = vmul.f32 %v498, %v530
      %v706 = vmul.f32 %v499, %v514
      %v707 = vmul.f32 %v500, %v518
      %v708 = vmul.f32 %v501, %v522
      %v709 = vmul.f32 %v502, %v526
      %v710 = vmul.f32 %v503, %v530
      %v711 = vmul.f32 %v504, %v514
      %v712 = vmul.f32 %v505, %v518
      %v713 = vmul.f32 %v506, %v522
      %v714 = vmul.f32 %v507, %v526
      %v715 = vmul.f32 %v508, %v530
      %v716 = vld [vmem:[%s0] sm:$0xff]
      %v717 = vld [vmem:[%s0 + $0x8] sm:$0xff]
      %v718 = vld [vmem:[%s0 + $0x10] sm:$0xff]
      %v719 = vld [vmem:[%s0 + $0x18] sm:$0xff]
      %v720 = vld [vmem:[%s0 + $0x20] sm:$0xff]
      %v721 = vld [vmem:[%s0 + $0x28] sm:$0xff]
      %v722 = vld [vmem:[%s0 + $0x30] sm:$0xff]
      %v723 = vld [vmem:[%s0 + $0x38] sm:$0xff]
      %v724 = vld [vmem:[%s0 + $0x40] sm:$0xff]
      %v725 = vld [vmem:[%s0 + $0x48] sm:$0xff]
      %v726 = vld [vmem:[%s0 + $0x50] sm:$0xff]
      %v727 = vld [vmem:[%s0 + $0x58] sm:$0xff]
      %v728 = vld [vmem:[%s0 + $0x60] sm:$0xff]
      %v729 = vld [vmem:[%s0 + $0x68] sm:$0xff]
      %v730 = vld [vmem:[%s0 + $0x70] sm:$0xff]
      %v731 = vld [vmem:[%s0 + $0x78] sm:$0xff]
      %v732 = vld [vmem:[%s0 + $0x80] sm:$0xff]
      %v733 = vld [vmem:[%s0 + $0x88] sm:$0xff]
      %v734 = vld [vmem:[%s0 + $0x90] sm:$0xff]
      %v735 = vld [vmem:[%s0 + $0x98] sm:$0xff]
      %v736 = vld [vmem:[%s0 + $0xa0] sm:$0xff]
      %v737 = vld [vmem:[%s0 + $0xa8] sm:$0xff]
      %v738 = vld [vmem:[%s0 + $0xb0] sm:$0xff]
      %v739 = vld [vmem:[%s0 + $0xb8] sm:$0xff]
      %v740 = vld [vmem:[%s0 + $0xc0] sm:$0xff]
      %v741 = vld [vmem:[%s0 + $0xc8] sm:$0xff]
      %v742 = vld [vmem:[%s0 + $0xd0] sm:$0xff]
      %v743 = vld [vmem:[%s0 + $0xd8] sm:$0xff]
      %v744 = vld [vmem:[%s0 + $0xe0] sm:$0xff]
      %v745 = vld [vmem:[%s0 + $0xe8] sm:$0xff]
      %v746 = vld [vmem:[%s0 + $0xf0] sm:$0xff]
      %v747 = vld [vmem:[%s0 + $0xf8] sm:$0xff]
      %v748 = vld [vmem:[%s0 + $0x100] sm:$0xff]
      %v749 = vld [vmem:[%s0 + $0x108] sm:$0xff]
      %v750 = vld [vmem:[%s0 + $0x110] sm:$0xff]
      %v751 = vld [vmem:[%s0 + $0x118] sm:$0xff]
      %v752 = vld [vmem:[%s0 + $0x120] sm:$0xff]
      %v753 = vld [vmem:[%s0 + $0x128] sm:$0xff]
      %v754 = vld [vmem:[%s0 + $0x130] sm:$0xff]
      %v755 = vld [vmem:[%s0 + $0x138] sm:$0xff]
      %v756 = vld [vmem:[%s0 + $0x140] sm:$0xff]
      %v757 = vld [vmem:[%s0 + $0x148] sm:$0xff]
      %v758 = vld [vmem:[%s0 + $0x150] sm:$0xff]
      %v759 = vld [vmem:[%s0 + $0x158] sm:$0xff]
      %v760 = vld [vmem:[%s0 + $0x160] sm:$0xff]
      %v761 = vld [vmem:[%s0 + $0x168] sm:$0xff]
      %v762 = vld [vmem:[%s0 + $0x170] sm:$0xff]
      %v763 = vld [vmem:[%s0 + $0x178] sm:$0xff]
      %v764 = vld [vmem:[%s0 + $0x180] sm:$0xff]
      %v765 = vld [vmem:[%s0 + $0x188] sm:$0xff]
      %v766 = vld [vmem:[%s0 + $0x190] sm:$0xff]
      %v767 = vld [vmem:[%s0 + $0x198] sm:$0xff]
      %v768 = vld [vmem:[%s0 + $0x1a0] sm:$0xff]
      %v769 = vld [vmem:[%s0 + $0x1a8] sm:$0xff]
      %v770 = vld [vmem:[%s0 + $0x1b0] sm:$0xff]
      %v771 = vld [vmem:[%s0 + $0x1b8] sm:$0xff]
      %v772 = vld [vmem:[%s0 + $0x1c0] sm:$0xff]
      %v773 = vld [vmem:[%s0 + $0x1c8] sm:$0xff]
      %v774 = vld [vmem:[%s0 + $0x1d0] sm:$0xff]
      %v775 = vld [vmem:[%s0 + $0x1d8] sm:$0xff]
      %v776 = vld [vmem:[%s0 + $0x1e0] sm:$0xff]
      %v777 = vld [vmem:[%s0 + $0x1e8] sm:$0xff]
      %v778 = vld [vmem:[%s0 + $0x1f0] sm:$0xff]
      %v779 = vld [vmem:[%s0 + $0x1f8] sm:$0xff]
      %v780 = vld [vmem:[%s0 + $0x200] sm:$0xff]
      %v781 = vld [vmem:[%s0 + $0x208] sm:$0xff]
      %v782 = vld [vmem:[%s0 + $0x210] sm:$0xff]
      %v783 = vld [vmem:[%s0 + $0x218] sm:$0xff]
      %v784 = vld [vmem:[%s0 + $0x220] sm:$0xff]
      %v785 = vld [vmem:[%s0 + $0x228] sm:$0xff]
      %v786 = vld [vmem:[%s0 + $0x230] sm:$0xff]
      %v787 = vld [vmem:[%s0 + $0x238] sm:$0xff]
      %v788 = vld [vmem:[%s0 + $0x240] sm:$0xff]
      %v789 = vld [vmem:[%s0 + $0x248] sm:$0xff]
      %v790 = vld [vmem:[%s0 + $0x250] sm:$0xff]
      %v791 = vld [vmem:[%s0 + $0x258] sm:$0xff]
      %v792 = vld [vmem:[%s0 + $0x260] sm:$0xff]
      %v793 = vld [vmem:[%s0 + $0x268] sm:$0xff]
      %v794 = vld [vmem:[%s0 + $0x270] sm:$0xff]
      %v795 = vld [vmem:[%s0 + $0x278] sm:$0xff]
      %v796 = vld [vmem:[%s0 + $0x280] sm:$0xff]
      %v797 = vld [vmem:[%s0 + $0x288] sm:$0xff]
      %v798 = vld [vmem:[%s0 + $0x290] sm:$0xff]
      %v799 = vld [vmem:[%s0 + $0x298] sm:$0xff]
      %v800 = vld [vmem:[%s0 + $0x2a0] sm:$0xff]
      %v801 = vld [vmem:[%s0 + $0x2a8] sm:$0xff]
      %v802 = vld [vmem:[%s0 + $0x2b0] sm:$0xff]
      %v803 = vld [vmem:[%s0 + $0x2b8] sm:$0xff]
      %v804 = vld [vmem:[%s0 + $0x2c0] sm:$0xff]
      %v805 = vld [vmem:[%s0 + $0x2c8] sm:$0xff]
      %v806 = vld [vmem:[%s0 + $0x2d0] sm:$0xff]
      %v807 = vld [vmem:[%s0 + $0x2d8] sm:$0xff]
      %v808 = vld [vmem:[%s0 + $0x2e0] sm:$0xff]
      %v809 = vld [vmem:[%s0 + $0x2e8] sm:$0xff]
      %v810 = vld [vmem:[%s0 + $0x2f0] sm:$0xff]
      %v811 = vld [vmem:[%s0 + $0x2f8] sm:$0xff]
      %v812 = vld [vmem:[%s0 + $0x300] sm:$0xff]
      %v813 = vld [vmem:[%s0 + $0x308] sm:$0xff]
      %v814 = vld [vmem:[%s0 + $0x310] sm:$0xff]
      %v815 = vld [vmem:[%s0 + $0x318] sm:$0xff]
      %v816 = vld [vmem:[%s0 + $0x320] sm:$0xff]
      %v817 = vld [vmem:[%s0 + $0x328] sm:$0xff]
      %v818 = vld [vmem:[%s0 + $0x330] sm:$0xff]
      %v819 = vld [vmem:[%s0 + $0x338] sm:$0xff]
      %v820 = vld [vmem:[%s0 + $0x340] sm:$0xff]
      %v821 = vld [vmem:[%s0 + $0x348] sm:$0xff]
      %v822 = vld [vmem:[%s0 + $0x350] sm:$0xff]
      %v823 = vld [vmem:[%s0 + $0x358] sm:$0xff]
      %v824 = vld [vmem:[%s0 + $0x360] sm:$0xff]
      %v825 = vld [vmem:[%s0 + $0x368] sm:$0xff]
      %v826 = vld [vmem:[%s0 + $0x370] sm:$0xff]
      %v827 = vld [vmem:[%s0 + $0x378] sm:$0xff]
      %v828 = vld [vmem:[%s0 + $0x380] sm:$0xff]
      %v829 = vld [vmem:[%s0 + $0x388] sm:$0xff]
      %v830 = vld [vmem:[%s0 + $0x390] sm:$0xff]
      %v831 = vld [vmem:[%s0 + $0x398] sm:$0xff]
      %v832 = vld [vmem:[%s0 + $0x3a0] sm:$0xff]
      %v833 = vld [vmem:[%s0 + $0x3a8] sm:$0xff]
      %v834 = vld [vmem:[%s0 + $0x3b0] sm:$0xff]
      %v835 = vld [vmem:[%s0 + $0x3b8] sm:$0xff]
      %v836 = vld [vmem:[%s0 + $0x3c0] sm:$0xff]
      %v837 = vld [vmem:[%s0 + $0x3c8] sm:$0xff]
      %v838 = vld [vmem:[%s0 + $0x3d0] sm:$0xff]
      %v839 = vld [vmem:[%s0 + $0x3d8] sm:$0xff]
      %v840 = vld [vmem:[%s0 + $0x3e0] sm:$0xff]
      %v841 = vld [vmem:[%s0 + $0x3e8] sm:$0xff]
      %v842 = vld [vmem:[%s0 + $0x3f0] sm:$0xff]
      %v843 = vld [vmem:[%s0 + $0x3f8] sm:$0xff]
      %v844 = vld [vmem:[%s0 + $0x400] sm:$0xff]
      %v845 = vld [vmem:[%s0 + $0x408] sm:$0xff]
      %v846 = vld [vmem:[%s0 + $0x410] sm:$0xff]
      %v847 = vld [vmem:[%s0 + $0x418] sm:$0xff]
      %v848 = vld [vmem:[%s0 + $0x420] sm:$0xff]
      %v849 = vld [vmem:[%s0 + $0x428] sm:$0xff]
      %v850 = vld [vmem:[%s0 + $0x430] sm:$0xff]
      %v851 = vld [vmem:[%s0 + $0x438] sm:$0xff]
      %v852 = vld [vmem:[%s0 + $0x440] sm:$0xff]
      %v853 = vld [vmem:[%s0 + $0x448] sm:$0xff]
      %v854 = vld [vmem:[%s0 + $0x450] sm:$0xff]
      %v855 = vld [vmem:[%s0 + $0x458] sm:$0xff]
      %v856 = vld [vmem:[%s0 + $0x460] sm:$0xff]
      %v857 = vld [vmem:[%s0 + $0x468] sm:$0xff]
      %v858 = vld [vmem:[%s0 + $0x470] sm:$0xff]
      %v859 = vld [vmem:[%s0 + $0x478] sm:$0xff]
      %vm860 = vcmask 523264
      %v862 = vsel %vm860, %v540, 0
      %v865 = vsel %vm860, %v545, 0
      %v868 = vsel %vm860, %v550, 0
      %v871 = vsel %vm860, %v555, 0
      %v874 = vsel %vm860, %v560, 0
      %v877 = vsel %vm860, %v565, 0
      %v880 = vsel %vm860, %v570, 0
      %v883 = vsel %vm860, %v575, 0
      %v886 = vsel %vm860, %v580, 0
      %v889 = vsel %vm860, %v585, 0
      %v892 = vsel %vm860, %v590, 0
      %v895 = vsel %vm860, %v595, 0
      %v898 = vsel %vm860, %v600, 0
      %v901 = vsel %vm860, %v605, 0
      %v904 = vsel %vm860, %v610, 0
      %v907 = vsel %vm860, %v615, 0
      %v910 = vsel %vm860, %v620, 0
      %v913 = vsel %vm860, %v625, 0
      %v916 = vsel %vm860, %v630, 0
      %v919 = vsel %vm860, %v635, 0
      %v922 = vsel %vm860, %v640, 0
      %v925 = vsel %vm860, %v645, 0
      %v928 = vsel %vm860, %v650, 0
      %v931 = vsel %vm860, %v655, 0
      %v934 = vsel %vm860, %v660, 0
      %v937 = vsel %vm860, %v665, 0
      %v940 = vsel %vm860, %v670, 0
      %v943 = vsel %vm860, %v675, 0
      %v946 = vsel %vm860, %v680, 0
      %v949 = vsel %vm860, %v685, 0
      %v952 = vsel %vm860, %v690, 0
      %v955 = vsel %vm860, %v695, 0
      %v958 = vsel %vm860, %v700, 0
      %v961 = vsel %vm860, %v705, 0
      %v964 = vsel %vm860, %v710, 0
      %v967 = vsel %vm860, %v715, 0
      %969 = vmatprep.subr.mxu0 %v717
      %970 = vmatpush1.msra.mxu0 %v716
      %971 = vmatprep.subr.mxu0 %v719
      %972 = vmatpush1.msra.mxu0 %v718
      %973 = vmatprep.subr.mxu0 %v721
      %974 = vmatpush1.msra.mxu0 %v720
      %975 = vmatprep.subr.mxu0 %v723
      %976 = vmatpush1.msra.mxu0 %v722
      %977 = vmatprep.subr.mxu0 %v725
      %978 = vmatpush1.msra.mxu0 %v724
      %979 = vmatprep.subr.mxu0 %v727
      %980 = vmatpush1.msra.mxu0 %v726
      %981 = vmatprep.subr.mxu0 %v729
      %982 = vmatpush1.msra.mxu0 %v728
      %983 = vmatprep.subr.mxu0 %v731
      %984 = vmatpush1.msra.mxu0 %v730
      %985 = vmatprep.subr.mxu0 %v733
      %986 = vmatpush1.msra.mxu0 %v732
      %987 = vmatprep.subr.mxu0 %v735
      %988 = vmatpush1.msra.mxu0 %v734
      %989 = vmatprep.subr.mxu0 %v737
      %990 = vmatpush1.msra.mxu0 %v736
      %991 = vmatprep.subr.mxu0 %v739
      %992 = vmatpush1.msra.mxu0 %v738
      %993 = vmatprep.subr.mxu0 %v741
      %994 = vmatpush1.msra.mxu0 %v740
      %995 = vmatprep.subr.mxu0 %v743
      %996 = vmatpush1.msra.mxu0 %v742
      %997 = vmatprep.subr.mxu0 %v745
      %998 = vmatpush1.msra.mxu0 %v744
      %999 = vmatprep.subr.mxu0 %v747
      %1000 = vmatpush1.msra.mxu0 %v746
      %1001 = vmatprep.subr.mxu0 %v749
      %1002 = vmatpush1.msra.mxu0 %v748
      %1003 = vmatprep.subr.mxu0 %v751
      %1004 = vmatpush1.msra.mxu0 %v750
      %1005 = vmatprep.subr.mxu0 %v753
      %1006 = vmatpush1.msra.mxu0 %v752
      %1007 = vmatprep.subr.mxu0 %v755
      %1008 = vmatpush1.msra.mxu0 %v754
      %1009 = vmatprep.subr.mxu0 %v757
      %1010 = vmatpush1.msra.mxu0 %v756
      %1011 = vmatprep.subr.mxu0 %v759
      %1012 = vmatpush1.msra.mxu0 %v758
      %1013 = vmatprep.subr.mxu0 %v761
      %1014 = vmatpush1.msra.mxu0 %v760
      %1015 = vmatprep.subr.mxu0 %v763
      %1016 = vmatpush1.msra.mxu0 %v762
      %1017 = vmatprep.subr.mxu0 %v765
      %1018 = vmatpush1.msra.mxu0 %v764
      %1019 = vmatprep.subr.mxu0 %v767
      %1020 = vmatpush1.msra.mxu0 %v766
      %1021 = vmatprep.subr.mxu0 %v769
      %1022 = vmatpush1.msra.mxu0 %v768
      %1023 = vmatprep.subr.mxu0 %v771
      %1024 = vmatpush1.msra.mxu0 %v770
      %1025 = vmatprep.subr.mxu0 %v773
      %1026 = vmatpush1.msra.mxu0 %v772
      %1027 = vmatprep.subr.mxu0 %v775
      %1028 = vmatpush1.msra.mxu0 %v774
      %1029 = vmatprep.subr.mxu0 %v777
      %1030 = vmatpush1.msra.mxu0 %v776
      %1031 = vmatprep.subr.mxu0 %v779
      %1032 = vmatpush1.msra.mxu0 %v778
      %1033 = vmatprep.mubr.f32.mxu0 %v537
      %1034 = vmatmul.mubr.f32.gmra.mrb[0].mxu0 %v536
      %v1035 = vpop.f32.mrb[0].mxu0
      %v1036 = vadd.f32 0.0, %v1035
      %v1037 = vpop.f32.mrb[0].mxu0
      %v1038 = vadd.f32 0.0, %v1037
      %1039 = vmatprep.mubr.f32.mxu0 %v542
      %1040 = vmatmul.mubr.f32.gmra.mrb[0].mxu0 %v541
      %v1041 = vpop.f32.mrb[0].mxu0
      %v1042 = vadd.f32 0.0, %v1041
      %v1043 = vpop.f32.mrb[0].mxu0
      %v1044 = vadd.f32 0.0, %v1043
      %1045 = vmatprep.mubr.f32.mxu0 %v547
      %1046 = vmatmul.mubr.f32.gmra.mrb[0].mxu0 %v546
      %v1047 = vpop.f32.mrb[0].mxu0
      %v1048 = vadd.f32 0.0, %v1047
      %v1049 = vpop.f32.mrb[0].mxu0
      %v1050 = vadd.f32 0.0, %v1049
      %1051 = vmatprep.mubr.f32.mxu0 %v552
      %1052 = vmatmul.mubr.f32.gmra.mrb[0].mxu0 %v551
      %v1053 = vpop.f32.mrb[0].mxu0
      %v1054 = vadd.f32 0.0, %v1053
      %v1055 = vpop.f32.mrb[0].mxu0
      %v1056 = vadd.f32 0.0, %v1055
      %1057 = vmatprep.mubr.f32.mxu0 %v557
      %1058 = vmatmul.mubr.f32.gmra.mrb[0].mxu0 %v556
      %v1059 = vpop.f32.mrb[0].mxu0
      %v1060 = vadd.f32 0.0, %v1059
      %v1061 = vpop.f32.mrb[0].mxu0
      %v1062 = vadd.f32 0.0, %v1061
      %1063 = vmatprep.mubr.f32.mxu0 %v562
      %1064 = vmatmul.mubr.f32.gmra.mrb[0].mxu0 %v561
      %v1065 = vpop.f32.mrb[0].mxu0
      %v1066 = vadd.f32 0.0, %v1065
      %v1067 = vpop.f32.mrb[0].mxu0
      %v1068 = vadd.f32 0.0, %v1067
      %1069 = vmatprep.mubr.f32.mxu0 %v567
      %1070 = vmatmul.mubr.f32.gmra.mrb[0].mxu0 %v566
      %v1071 = vpop.f32.mrb[0].mxu0
      %v1072 = vadd.f32 0.0, %v1071
      %v1073 = vpop.f32.mrb[0].mxu0
      %v1074 = vadd.f32 0.0, %v1073
      %1075 = vmatprep.mubr.f32.mxu0 %v572
      %1076 = vmatmul.mubr.f32.gmra.mrb[0].mxu0 %v571
      %v1077 = vpop.f32.mrb[0].mxu0
      %v1078 = vadd.f32 0.0, %v1077
      %v1079 = vpop.f32.mrb[0].mxu0
      %v1080 = vadd.f32 0.0, %v1079
      %1081 = vmatprep.mubr.f32.mxu0 %v577
      %1082 = vmatmul.mubr.f32.gmra.mrb[0].mxu0 %v576
      %v1083 = vpop.f32.mrb[0].mxu0
      %v1084 = vadd.f32 0.0, %v1083
      %v1085 = vpop.f32.mrb[0].mxu0
      %v1086 = vadd.f32 0.0, %v1085
      %1087 = vmatprep.mubr.f32.mxu0 %v582
      %1088 = vmatmul.mubr.f32.gmra.mrb[0].mxu0 %v581
      %v1089 = vpop.f32.mrb[0].mxu0
      %v1090 = vadd.f32 0.0, %v1089
      %v1091 = vpop.f32.mrb[0].mxu0
      %v1092 = vadd.f32 0.0, %v1091
      %1093 = vmatprep.mubr.f32.mxu0 %v587
      %1094 = vmatmul.mubr.f32.gmra.mrb[0].mxu0 %v586
      %v1095 = vpop.f32.mrb[0].mxu0
      %v1096 = vadd.f32 0.0, %v1095
      %v1097 = vpop.f32.mrb[0].mxu0
      %v1098 = vadd.f32 0.0, %v1097
      %1099 = vmatprep.mubr.f32.mxu0 %v592
      %1100 = vmatmul.mubr.f32.gmra.mrb[0].mxu0 %v591
      %v1101 = vpop.f32.mrb[0].mxu0
      %v1102 = vadd.f32 0.0, %v1101
      %v1103 = vpop.f32.mrb[0].mxu0
      %v1104 = vadd.f32 0.0, %v1103
      %1105 = vmatprep.mubr.f32.mxu0 %v597
      %1106 = vmatmul.mubr.f32.gmra.mrb[0].mxu0 %v596
      %v1107 = vpop.f32.mrb[0].mxu0
      %v1108 = vadd.f32 0.0, %v1107
      %v1109 = vpop.f32.mrb[0].mxu0
      %v1110 = vadd.f32 0.0, %v1109
      %1111 = vmatprep.mubr.f32.mxu0 %v602
      %1112 = vmatmul.mubr.f32.gmra.mrb[0].mxu0 %v601
      %v1113 = vpop.f32.mrb[0].mxu0
      %v1114 = vadd.f32 0.0, %v1113
      %v1115 = vpop.f32.mrb[0].mxu0
      %v1116 = vadd.f32 0.0, %v1115
      %1117 = vmatprep.mubr.f32.mxu0 %v607
      %1118 = vmatmul.mubr.f32.gmra.mrb[0].mxu0 %v606
      %v1119 = vpop.f32.mrb[0].mxu0
      %v1120 = vadd.f32 0.0, %v1119
      %v1121 = vpop.f32.mrb[0].mxu0
      %v1122 = vadd.f32 0.0, %v1121
      %1123 = vmatprep.mubr.f32.mxu0 %v612
      %1124 = vmatmul.mubr.f32.gmra.mrb[0].mxu0 %v611
      %v1125 = vpop.f32.mrb[0].mxu0
      %v1126 = vadd.f32 0.0, %v1125
      %v1127 = vpop.f32.mrb[0].mxu0
      %v1128 = vadd.f32 0.0, %v1127
      %1129 = vmatprep.mubr.f32.mxu0 %v617
      %1130 = vmatmul.mubr.f32.gmra.mrb[0].mxu0 %v616
      %v1131 = vpop.f32.mrb[0].mxu0
      %v1132 = vadd.f32 0.0, %v1131
      %v1133 = vpop.f32.mrb[0].mxu0
      %v1134 = vadd.f32 0.0, %v1133
      %1135 = vmatprep.mubr.f32.mxu0 %v622
      %1136 = vmatmul.mubr.f32.gmra.mrb[0].mxu0 %v621
      %v1137 = vpop.f32.mrb[0].mxu0
      %v1138 = vadd.f32 0.0, %v1137
      %v1139 = vpop.f32.mrb[0].mxu0
      %v1140 = vadd.f32 0.0, %v1139
      %1141 = vmatprep.mubr.f32.mxu0 %v627
      %1142 = vmatmul.mubr.f32.gmra.mrb[0].mxu0 %v626
      %v1143 = vpop.f32.mrb[0].mxu0
      %v1144 = vadd.f32 0.0, %v1143
      %v1145 = vpop.f32.mrb[0].mxu0
      %v1146 = vadd.f32 0.0, %v1145
      %1147 = vmatprep.mubr.f32.mxu0 %v632
      %1148 = vmatmul.mubr.f32.gmra.mrb[0].mxu0 %v631
      %v1149 = vpop.f32.mrb[0].mxu0
      %v1150 = vadd.f32 0.0, %v1149
      %v1151 = vpop.f32.mrb[0].mxu0
      %v1152 = vadd.f32 0.0, %v1151
      %1153 = vmatprep.mubr.f32.mxu0 %v637
      %1154 = vmatmul.mubr.f32.gmra.mrb[0].mxu0 %v636
      %v1155 = vpop.f32.mrb[0].mxu0
      %v1156 = vadd.f32 0.0, %v1155
      %v1157 = vpop.f32.mrb[0].mxu0
      %v1158 = vadd.f32 0.0, %v1157
      %1159 = vmatprep.mubr.f32.mxu0 %v642
      %1160 = vmatmul.mubr.f32.gmra.mrb[0].mxu0 %v641
      %v1161 = vpop.f32.mrb[0].mxu0
      %v1162 = vadd.f32 0.0, %v1161
      %v1163 = vpop.f32.mrb[0].mxu0
      %v1164 = vadd.f32 0.0, %v1163
      %1165 = vmatprep.mubr.f32.mxu0 %v647
      %1166 = vmatmul.mubr.f32.gmra.mrb[0].mxu0 %v646
      %v1167 = vpop.f32.mrb[0].mxu0
      %v1168 = vadd.f32 0.0, %v1167
      %v1169 = vpop.f32.mrb[0].mxu0
      %v1170 = vadd.f32 0.0, %v1169
      %1171 = vmatprep.mubr.f32.mxu0 %v652
      %1172 = vmatmul.mubr.f32.gmra.mrb[0].mxu0 %v651
      %v1173 = vpop.f32.mrb[0].mxu0
      %v1174 = vadd.f32 0.0, %v1173
      %v1175 = vpop.f32.mrb[0].mxu0
      %v1176 = vadd.f32 0.0, %v1175
      %1177 = vmatprep.mubr.f32.mxu0 %v657
      %1178 = vmatmul.mubr.f32.gmra.mrb[0].mxu0 %v656
      %v1179 = vpop.f32.mrb[0].mxu0
      %v1180 = vadd.f32 0.0, %v1179
      %v1181 = vpop.f32.mrb[0].mxu0
      %v1182 = vadd.f32 0.0, %v1181
      %1183 = vmatprep.mubr.f32.mxu0 %v662
      %1184 = vmatmul.mubr.f32.gmra.mrb[0].mxu0 %v661
      %v1185 = vpop.f32.mrb[0].mxu0
      %v1186 = vadd.f32 0.0, %v1185
      %v1187 = vpop.f32.mrb[0].mxu0
      %v1188 = vadd.f32 0.0, %v1187
      %1189 = vmatprep.mubr.f32.mxu0 %v667
      %1190 = vmatmul.mubr.f32.gmra.mrb[0].mxu0 %v666
      %v1191 = vpop.f32.mrb[0].mxu0
      %v1192 = vadd.f32 0.0, %v1191
      %v1193 = vpop.f32.mrb[0].mxu0
      %v1194 = vadd.f32 0.0, %v1193
      %1195 = vmatprep.mubr.f32.mxu0 %v672
      %1196 = vmatmul.mubr.f32.gmra.mrb[0].mxu0 %v671
      %v1197 = vpop.f32.mrb[0].mxu0
      %v1198 = vadd.f32 0.0, %v1197
      %v1199 = vpop.f32.mrb[0].mxu0
      %v1200 = vadd.f32 0.0, %v1199
      %1201 = vmatprep.mubr.f32.mxu0 %v677
      %1202 = vmatmul.mubr.f32.gmra.mrb[0].mxu0 %v676
      %v1203 = vpop.f32.mrb[0].mxu0
      %v1204 = vadd.f32 0.0, %v1203
      %v1205 = vpop.f32.mrb[0].mxu0
      %v1206 = vadd.f32 0.0, %v1205
      %1207 = vmatprep.mubr.f32.mxu0 %v682
      %1208 = vmatmul.mubr.f32.gmra.mrb[0].mxu0 %v681
      %v1209 = vpop.f32.mrb[0].mxu0
      %v1210 = vadd.f32 0.0, %v1209
      %v1211 = vpop.f32.mrb[0].mxu0
      %v1212 = vadd.f32 0.0, %v1211
      %1213 = vmatprep.mubr.f32.mxu0 %v687
      %1214 = vmatmul.mubr.f32.gmra.mrb[0].mxu0 %v686
      %v1215 = vpop.f32.mrb[0].mxu0
      %v1216 = vadd.f32 0.0, %v1215
      %v1217 = vpop.f32.mrb[0].mxu0
      %v1218 = vadd.f32 0.0, %v1217
      %1219 = vmatprep.mubr.f32.mxu0 %v692
      %1220 = vmatmul.mubr.f32.gmra.mrb[0].mxu0 %v691
      %v1221 = vpop.f32.mrb[0].mxu0
      %v1222 = vadd.f32 0.0, %v1221
      %v1223 = vpop.f32.mrb[0].mxu0
      %v1224 = vadd.f32 0.0, %v1223
      %1225 = vmatprep.mubr.f32.mxu0 %v697
      %1226 = vmatmul.mubr.f32.gmra.mrb[0].mxu0 %v696
      %v1227 = vpop.f32.mrb[0].mxu0
      %v1228 = vadd.f32 0.0, %v1227
      %v1229 = vpop.f32.mrb[0].mxu0
      %v1230 = vadd.f32 0.0, %v1229
      %1231 = vmatprep.mubr.f32.mxu0 %v702
      %1232 = vmatmul.mubr.f32.gmra.mrb[0].mxu0 %v701
      %v1233 = vpop.f32.mrb[0].mxu0
      %v1234 = vadd.f32 0.0, %v1233
      %v1235 = vpop.f32.mrb[0].mxu0
      %v1236 = vadd.f32 0.0, %v1235
      %1237 = vmatprep.mubr.f32.mxu0 %v707
      %1238 = vmatmul.mubr.f32.gmra.mrb[0].mxu0 %v706
      %v1239 = vpop.f32.mrb[0].mxu0
      %v1240 = vadd.f32 0.0, %v1239
      %v1241 = vpop.f32.mrb[0].mxu0
      %v1242 = vadd.f32 0.0, %v1241
      %1243 = vmatprep.mubr.f32.mxu0 %v712
      %1244 = vmatmul.mubr.f32.gmra.mrb[0].mxu0 %v711
      %v1245 = vpop.f32.mrb[0].mxu0
      %v1246 = vadd.f32 0.0, %v1245
      %v1247 = vpop.f32.mrb[0].mxu0
      %v1248 = vadd.f32 0.0, %v1247
      %1249 = vdwg.mxu0
      %1250 = vmatprep.subr.mxu0 %v781
      %1251 = vmatpush1.msra.mxu0 %v780
      %1252 = vmatprep.subr.mxu0 %v783
      %1253 = vmatpush1.msra.mxu0 %v782
      %1254 = vmatprep.subr.mxu0 %v785
      %1255 = vmatpush1.msra.mxu0 %v784
      %1256 = vmatprep.subr.mxu0 %v787
      %1257 = vmatpush1.msra.mxu0 %v786
      %1258 = vmatprep.subr.mxu0 %v789
      %1259 = vmatpush1.msra.mxu0 %v788
      %1260 = vmatprep.subr.mxu0 %v791
      %1261 = vmatpush1.msra.mxu0 %v790
      %1262 = vmatprep.subr.mxu0 %v793
      %1263 = vmatpush1.msra.mxu0 %v792
      %1264 = vmatprep.subr.mxu0 %v795
      %1265 = vmatpush1.msra.mxu0 %v794
      %1266 = vmatprep.subr.mxu0 %v797
      %1267 = vmatpush1.msra.mxu0 %v796
      %1268 = vmatprep.subr.mxu0 %v799
      %1269 = vmatpush1.msra.mxu0 %v798
      %1270 = vmatprep.subr.mxu0 %v801
      %1271 = vmatpush1.msra.mxu0 %v800
      %1272 = vmatprep.subr.mxu0 %v803
      %1273 = vmatpush1.msra.mxu0 %v802
      %1274 = vmatprep.subr.mxu0 %v805
      %1275 = vmatpush1.msra.mxu0 %v804
      %1276 = vmatprep.subr.mxu0 %v807
      %1277 = vmatpush1.msra.mxu0 %v806
      %1278 = vmatprep.subr.mxu0 %v809
      %1279 = vmatpush1.msra.mxu0 %v808
      %1280 = vmatprep.subr.mxu0 %v811
      %1281 = vmatpush1.msra.mxu0 %v810
      %1282 = vmatprep.subr.mxu0 %v813
      %1283 = vmatpush1.msra.mxu0 %v812
      %1284 = vmatprep.subr.mxu0 %v815
      %1285 = vmatpush1.msra.mxu0 %v814
      %1286 = vmatprep.subr.mxu0 %v817
      %1287 = vmatpush1.msra.mxu0 %v816
      %1288 = vmatprep.subr.mxu0 %v819
      %1289 = vmatpush1.msra.mxu0 %v818
      %1290 = vmatprep.subr.mxu0 %v821
      %1291 = vmatpush1.msra.mxu0 %v820
      %1292 = vmatprep.subr.mxu0 %v823
      %1293 = vmatpush1.msra.mxu0 %v822
      %1294 = vmatprep.subr.mxu0 %v825
      %1295 = vmatpush1.msra.mxu0 %v824
      %1296 = vmatprep.subr.mxu0 %v827
      %1297 = vmatpush1.msra.mxu0 %v826
      %1298 = vmatprep.subr.mxu0 %v829
      %1299 = vmatpush1.msra.mxu0 %v828
      %1300 = vmatprep.subr.mxu0 %v831
      %1301 = vmatpush1.msra.mxu0 %v830
      %1302 = vmatprep.subr.mxu0 %v833
      %1303 = vmatpush1.msra.mxu0 %v832
      %1304 = vmatprep.subr.mxu0 %v835
      %1305 = vmatpush1.msra.mxu0 %v834
      %1306 = vmatprep.subr.mxu0 %v837
      %1307 = vmatpush1.msra.mxu0 %v836
      %1308 = vmatprep.subr.mxu0 %v839
      %1309 = vmatpush1.msra.mxu0 %v838
      %1310 = vmatprep.subr.mxu0 %v841
      %1311 = vmatpush1.msra.mxu0 %v840
      %1312 = vmatprep.subr.mxu0 %v843
      %1313 = vmatpush1.msra.mxu0 %v842
      %1314 = vmatprep.mubr.f32.mxu0 %v539
      %1315 = vmatmul.mubr.f32.gmra.mrb[0].mxu0 %v538
      %v1316 = vpop.f32.mrb[0].mxu0
      %v1317 = vadd.f32 %v1036, %v1316
      %v1318 = vpop.f32.mrb[0].mxu0
      %v1319 = vadd.f32 %v1038, %v1318
      %1320 = vmatprep.mubr.f32.mxu0 %v544
      %1321 = vmatmul.mubr.f32.gmra.mrb[0].mxu0 %v543
      %v1322 = vpop.f32.mrb[0].mxu0
      %v1323 = vadd.f32 %v1042, %v1322
      %v1324 = vpop.f32.mrb[0].mxu0
      %v1325 = vadd.f32 %v1044, %v1324
      %1326 = vmatprep.mubr.f32.mxu0 %v549
      %1327 = vmatmul.mubr.f32.gmra.mrb[0].mxu0 %v548
      %v1328 = vpop.f32.mrb[0].mxu0
      %v1329 = vadd.f32 %v1048, %v1328
      %v1330 = vpop.f32.mrb[0].mxu0
      %v1331 = vadd.f32 %v1050, %v1330
      %1332 = vmatprep.mubr.f32.mxu0 %v554
      %1333 = vmatmul.mubr.f32.gmra.mrb[0].mxu0 %v553
      %v1334 = vpop.f32.mrb[0].mxu0
      %v1335 = vadd.f32 %v1054, %v1334
      %v1336 = vpop.f32.mrb[0].mxu0
      %v1337 = vadd.f32 %v1056, %v1336
      %1338 = vmatprep.mubr.f32.mxu0 %v559
      %1339 = vmatmul.mubr.f32.gmra.mrb[0].mxu0 %v558
      %v1340 = vpop.f32.mrb[0].mxu0
      %v1341 = vadd.f32 %v1060, %v1340
      %v1342 = vpop.f32.mrb[0].mxu0
      %v1343 = vadd.f32 %v1062, %v1342
      %1344 = vmatprep.mubr.f32.mxu0 %v564
      %1345 = vmatmul.mubr.f32.gmra.mrb[0].mxu0 %v563
      %v1346 = vpop.f32.mrb[0].mxu0
      %v1347 = vadd.f32 %v1066, %v1346
      %v1348 = vpop.f32.mrb[0].mxu0
      %v1349 = vadd.f32 %v1068, %v1348
      %1350 = vmatprep.mubr.f32.mxu0 %v569
      %1351 = vmatmul.mubr.f32.gmra.mrb[0].mxu0 %v568
      %v1352 = vpop.f32.mrb[0].mxu0
      %v1353 = vadd.f32 %v1072, %v1352
      %v1354 = vpop.f32.mrb[0].mxu0
      %v1355 = vadd.f32 %v1074, %v1354
      %1356 = vmatprep.mubr.f32.mxu0 %v574
      %1357 = vmatmul.mubr.f32.gmra.mrb[0].mxu0 %v573
      %v1358 = vpop.f32.mrb[0].mxu0
      %v1359 = vadd.f32 %v1078, %v1358
      %v1360 = vpop.f32.mrb[0].mxu0
      %v1361 = vadd.f32 %v1080, %v1360
      %1362 = vmatprep.mubr.f32.mxu0 %v579
      %1363 = vmatmul.mubr.f32.gmra.mrb[0].mxu0 %v578
      %v1364 = vpop.f32.mrb[0].mxu0
      %v1365 = vadd.f32 %v1084, %v1364
      %v1366 = vpop.f32.mrb[0].mxu0
      %v1367 = vadd.f32 %v1086, %v1366
      %1368 = vmatprep.mubr.f32.mxu0 %v584
      %1369 = vmatmul.mubr.f32.gmra.mrb[0].mxu0 %v583
      %v1370 = vpop.f32.mrb[0].mxu0
      %v1371 = vadd.f32 %v1090, %v1370
      %v1372 = vpop.f32.mrb[0].mxu0
      %v1373 = vadd.f32 %v1092, %v1372
      %1374 = vmatprep.mubr.f32.mxu0 %v589
      %1375 = vmatmul.mubr.f32.gmra.mrb[0].mxu0 %v588
      %v1376 = vpop.f32.mrb[0].mxu0
      %v1377 = vadd.f32 %v1096, %v1376
      %v1378 = vpop.f32.mrb[0].mxu0
      %v1379 = vadd.f32 %v1098, %v1378
      %1380 = vmatprep.mubr.f32.mxu0 %v594
      %1381 = vmatmul.mubr.f32.gmra.mrb[0].mxu0 %v593
      %v1382 = vpop.f32.mrb[0].mxu0
      %v1383 = vadd.f32 %v1102, %v1382
      %v1384 = vpop.f32.mrb[0].mxu0
      %v1385 = vadd.f32 %v1104, %v1384
      %1386 = vmatprep.mubr.f32.mxu0 %v599
      %1387 = vmatmul.mubr.f32.gmra.mrb[0].mxu0 %v598
      %v1388 = vpop.f32.mrb[0].mxu0
      %v1389 = vadd.f32 %v1108, %v1388
      %v1390 = vpop.f32.mrb[0].mxu0
      %v1391 = vadd.f32 %v1110, %v1390
      %1392 = vmatprep.mubr.f32.mxu0 %v604
      %1393 = vmatmul.mubr.f32.gmra.mrb[0].mxu0 %v603
      %v1394 = vpop.f32.mrb[0].mxu0
      %v1395 = vadd.f32 %v1114, %v1394
      %v1396 = vpop.f32.mrb[0].mxu0
      %v1397 = vadd.f32 %v1116, %v1396
      %1398 = vmatprep.mubr.f32.mxu0 %v609
      %1399 = vmatmul.mubr.f32.gmra.mrb[0].mxu0 %v608
      %v1400 = vpop.f32.mrb[0].mxu0
      %v1401 = vadd.f32 %v1120, %v1400
      %v1402 = vpop.f32.mrb[0].mxu0
      %v1403 = vadd.f32 %v1122, %v1402
      %1404 = vmatprep.mubr.f32.mxu0 %v614
      %1405 = vmatmul.mubr.f32.gmra.mrb[0].mxu0 %v613
      %v1406 = vpop.f32.mrb[0].mxu0
      %v1407 = vadd.f32 %v1126, %v1406
      %v1408 = vpop.f32.mrb[0].mxu0
      %v1409 = vadd.f32 %v1128, %v1408
      %1410 = vmatprep.mubr.f32.mxu0 %v619
      %1411 = vmatmul.mubr.f32.gmra.mrb[0].mxu0 %v618
      %v1412 = vpop.f32.mrb[0].mxu0
      %v1413 = vadd.f32 %v1132, %v1412
      %v1414 = vpop.f32.mrb[0].mxu0
      %v1415 = vadd.f32 %v1134, %v1414
      %1416 = vmatprep.mubr.f32.mxu0 %v624
      %1417 = vmatmul.mubr.f32.gmra.mrb[0].mxu0 %v623
      %v1418 = vpop.f32.mrb[0].mxu0
      %v1419 = vadd.f32 %v1138, %v1418
      %v1420 = vpop.f32.mrb[0].mxu0
      %v1421 = vadd.f32 %v1140, %v1420
      %1422 = vmatprep.mubr.f32.mxu0 %v629
      %1423 = vmatmul.mubr.f32.gmra.mrb[0].mxu0 %v628
      %v1424 = vpop.f32.mrb[0].mxu0
      %v1425 = vadd.f32 %v1144, %v1424
      %v1426 = vpop.f32.mrb[0].mxu0
      %v1427 = vadd.f32 %v1146, %v1426
      %1428 = vmatprep.mubr.f32.mxu0 %v634
      %1429 = vmatmul.mubr.f32.gmra.mrb[0].mxu0 %v633
      %v1430 = vpop.f32.mrb[0].mxu0
      %v1431 = vadd.f32 %v1150, %v1430
      %v1432 = vpop.f32.mrb[0].mxu0
      %v1433 = vadd.f32 %v1152, %v1432
      %1434 = vmatprep.mubr.f32.mxu0 %v639
      %1435 = vmatmul.mubr.f32.gmra.mrb[0].mxu0 %v638
      %v1436 = vpop.f32.mrb[0].mxu0
      %v1437 = vadd.f32 %v1156, %v1436
      %v1438 = vpop.f32.mrb[0].mxu0
      %v1439 = vadd.f32 %v1158, %v1438
      %1440 = vmatprep.mubr.f32.mxu0 %v644
      %1441 = vmatmul.mubr.f32.gmra.mrb[0].mxu0 %v643
      %v1442 = vpop.f32.mrb[0].mxu0
      %v1443 = vadd.f32 %v1162, %v1442
      %v1444 = vpop.f32.mrb[0].mxu0
      %v1445 = vadd.f32 %v1164, %v1444
      %1446 = vmatprep.mubr.f32.mxu0 %v649
      %1447 = vmatmul.mubr.f32.gmra.mrb[0].mxu0 %v648
      %v1448 = vpop.f32.mrb[0].mxu0
      %v1449 = vadd.f32 %v1168, %v1448
      %v1450 = vpop.f32.mrb[0].mxu0
      %v1451 = vadd.f32 %v1170, %v1450
      %1452 = vmatprep.mubr.f32.mxu0 %v654
      %1453 = vmatmul.mubr.f32.gmra.mrb[0].mxu0 %v653
      %v1454 = vpop.f32.mrb[0].mxu0
      %v1455 = vadd.f32 %v1174, %v1454
      %v1456 = vpop.f32.mrb[0].mxu0
      %v1457 = vadd.f32 %v1176, %v1456
      %1458 = vmatprep.mubr.f32.mxu0 %v659
      %1459 = vmatmul.mubr.f32.gmra.mrb[0].mxu0 %v658
      %v1460 = vpop.f32.mrb[0].mxu0
      %v1461 = vadd.f32 %v1180, %v1460
      %v1462 = vpop.f32.mrb[0].mxu0
      %v1463 = vadd.f32 %v1182, %v1462
      %1464 = vmatprep.mubr.f32.mxu0 %v664
      %1465 = vmatmul.mubr.f32.gmra.mrb[0].mxu0 %v663
      %v1466 = vpop.f32.mrb[0].mxu0
      %v1467 = vadd.f32 %v1186, %v1466
      %v1468 = vpop.f32.mrb[0].mxu0
      %v1469 = vadd.f32 %v1188, %v1468
      %1470 = vmatprep.mubr.f32.mxu0 %v669
      %1471 = vmatmul.mubr.f32.gmra.mrb[0].mxu0 %v668
      %v1472 = vpop.f32.mrb[0].mxu0
      %v1473 = vadd.f32 %v1192, %v1472
      %v1474 = vpop.f32.mrb[0].mxu0
      %v1475 = vadd.f32 %v1194, %v1474
      %1476 = vmatprep.mubr.f32.mxu0 %v674
      %1477 = vmatmul.mubr.f32.gmra.mrb[0].mxu0 %v673
      %v1478 = vpop.f32.mrb[0].mxu0
      %v1479 = vadd.f32 %v1198, %v1478
      %v1480 = vpop.f32.mrb[0].mxu0
      %v1481 = vadd.f32 %v1200, %v1480
      %1482 = vmatprep.mubr.f32.mxu0 %v679
      %1483 = vmatmul.mubr.f32.gmra.mrb[0].mxu0 %v678
      %v1484 = vpop.f32.mrb[0].mxu0
      %v1485 = vadd.f32 %v1204, %v1484
      %v1486 = vpop.f32.mrb[0].mxu0
      %v1487 = vadd.f32 %v1206, %v1486
      %1488 = vmatprep.mubr.f32.mxu0 %v684
      %1489 = vmatmul.mubr.f32.gmra.mrb[0].mxu0 %v683
      %v1490 = vpop.f32.mrb[0].mxu0
      %v1491 = vadd.f32 %v1210, %v1490
      %v1492 = vpop.f32.mrb[0].mxu0
      %v1493 = vadd.f32 %v1212, %v1492
      %1494 = vmatprep.mubr.f32.mxu0 %v689
      %1495 = vmatmul.mubr.f32.gmra.mrb[0].mxu0 %v688
      %v1496 = vpop.f32.mrb[0].mxu0
      %v1497 = vadd.f32 %v1216, %v1496
      %v1498 = vpop.f32.mrb[0].mxu0
      %v1499 = vadd.f32 %v1218, %v1498
      %1500 = vmatprep.mubr.f32.mxu0 %v694
      %1501 = vmatmul.mubr.f32.gmra.mrb[0].mxu0 %v693
      %v1502 = vpop.f32.mrb[0].mxu0
      %v1503 = vadd.f32 %v1222, %v1502
      %v1504 = vpop.f32.mrb[0].mxu0
      %v1505 = vadd.f32 %v1224, %v1504
      %1506 = vmatprep.mubr.f32.mxu0 %v699
      %1507 = vmatmul.mubr.f32.gmra.mrb[0].mxu0 %v698
      %v1508 = vpop.f32.mrb[0].mxu0
      %v1509 = vadd.f32 %v1228, %v1508
      %v1510 = vpop.f32.mrb[0].mxu0
      %v1511 = vadd.f32 %v1230, %v1510
      %1512 = vmatprep.mubr.f32.mxu0 %v704
      %1513 = vmatmul.mubr.f32.gmra.mrb[0].mxu0 %v703
      %v1514 = vpop.f32.mrb[0].mxu0
      %v1515 = vadd.f32 %v1234, %v1514
      %v1516 = vpop.f32.mrb[0].mxu0
      %v1517 = vadd.f32 %v1236, %v1516
      %1518 = vmatprep.mubr.f32.mxu0 %v709
      %1519 = vmatmul.mubr.f32.gmra.mrb[0].mxu0 %v708
      %v1520 = vpop.f32.mrb[0].mxu0
      %v1521 = vadd.f32 %v1240, %v1520
      %v1522 = vpop.f32.mrb[0].mxu0
      %v1523 = vadd.f32 %v1242, %v1522
      %1524 = vmatprep.mubr.f32.mxu0 %v714
      %1525 = vmatmul.mubr.f32.gmra.mrb[0].mxu0 %v713
      %v1526 = vpop.f32.mrb[0].mxu0
      %v1527 = vadd.f32 %v1246, %v1526
      %v1528 = vpop.f32.mrb[0].mxu0
      %v1529 = vadd.f32 %v1248, %v1528
      %1530 = vdwg.mxu0
      %1531 = vmatprep.subr.mxu0 %v845
      %1532 = vmatpush1.msra.mxu0 %v844
      %1533 = vmatprep.subr.mxu0 %v847
      %1534 = vmatpush1.msra.mxu0 %v846
      %1535 = vmatprep.subr.mxu0 %v849
      %1536 = vmatpush1.msra.mxu0 %v848
      %1537 = vmatprep.subr.mxu0 %v851
      %1538 = vmatpush1.msra.mxu0 %v850
      %1539 = vmatprep.subr.mxu0 %v853
      %1540 = vmatpush1.msra.mxu0 %v852
      %1541 = vmatprep.subr.mxu0 %v855
      %1542 = vmatpush1.msra.mxu0 %v854
      %1543 = vmatprep.subr.mxu0 %v857
      %1544 = vmatpush1.msra.mxu0 %v856
      %1545 = vmatprep.subr.mxu0 %v859
      %1546 = vmatpush1.msra.mxu0 %v858
      %1547 = vmatprep.subr.mxu0 0.0
      %1548 = vmatpush1.msra.mxu0 0.0
      %1549 = vmatprep.subr.mxu0 0.0
      %1550 = vmatpush1.msra.mxu0 0.0
      %1551 = vmatprep.subr.mxu0 0.0
      %1552 = vmatpush1.msra.mxu0 0.0
      %1553 = vmatprep.subr.mxu0 0.0
      %1554 = vmatpush1.msra.mxu0 0.0
      %1555 = vmatprep.subr.mxu0 0.0
      %1556 = vmatpush1.msra.mxu0 0.0
      %1557 = vmatprep.subr.mxu0 0.0
      %1558 = vmatpush1.msra.mxu0 0.0
      %1559 = vmatprep.subr.mxu0 0.0
      %1560 = vmatpush1.msra.mxu0 0.0
      %1561 = vmatprep.subr.mxu0 0.0
      %1562 = vmatpush1.msra.mxu0 0.0
      %1563 = vmatprep.subr.mxu0 0.0
      %1564 = vmatpush1.msra.mxu0 0.0
      %1565 = vmatprep.subr.mxu0 0.0
      %1566 = vmatpush1.msra.mxu0 0.0
      %1567 = vmatprep.subr.mxu0 0.0
      %1568 = vmatpush1.msra.mxu0 0.0
      %1569 = vmatprep.subr.mxu0 0.0
      %1570 = vmatpush1.msra.mxu0 0.0
      %1571 = vmatprep.subr.mxu0 0.0
      %1572 = vmatpush1.msra.mxu0 0.0
      %1573 = vmatprep.subr.mxu0 0.0
      %1574 = vmatpush1.msra.mxu0 0.0
      %1575 = vmatprep.subr.mxu0 0.0
      %1576 = vmatpush1.msra.mxu0 0.0
      %1577 = vmatprep.subr.mxu0 0.0
      %1578 = vmatpush1.msra.mxu0 0.0
      %1579 = vmatprep.subr.mxu0 0.0
      %1580 = vmatpush1.msra.mxu0 0.0
      %1581 = vmatprep.subr.mxu0 0.0
      %1582 = vmatpush1.msra.mxu0 0.0
      %1583 = vmatprep.subr.mxu0 0.0
      %1584 = vmatpush1.msra.mxu0 0.0
      %1585 = vmatprep.subr.mxu0 0.0
      %1586 = vmatpush1.msra.mxu0 0.0
      %1587 = vmatprep.subr.mxu0 0.0
      %1588 = vmatpush1.msra.mxu0 0.0
      %1589 = vmatprep.subr.mxu0 0.0
      %1590 = vmatpush1.msra.mxu0 0.0
      %1591 = vmatprep.subr.mxu0 0.0
      %1592 = vmatpush1.msra.mxu0 0.0
      %1593 = vmatprep.subr.mxu0 0.0
      %1594 = vmatpush1.msra.mxu0 0.0
      %1595 = vmatprep.mubr.f32.mxu0 0.0
      %1596 = vmatmul.mubr.f32.gmra.mrb[0].mxu0 %v862
      %v1597 = vpop.f32.mrb[0].mxu0
      %v1598 = vadd.f32 %v1317, %v1597
      %v1599 = vpop.f32.mrb[0].mxu0
      %v1600 = vadd.f32 %v1319, %v1599
      %1601 = vmatprep.mubr.f32.mxu0 0.0
      %1602 = vmatmul.mubr.f32.gmra.mrb[0].mxu0 %v865
      %v1603 = vpop.f32.mrb[0].mxu0
      %v1604 = vadd.f32 %v1323, %v1603
      %v1605 = vpop.f32.mrb[0].mxu0
      %v1606 = vadd.f32 %v1325, %v1605
      %1607 = vmatprep.mubr.f32.mxu0 0.0
      %1608 = vmatmul.mubr.f32.gmra.mrb[0].mxu0 %v868
      %v1609 = vpop.f32.mrb[0].mxu0
      %v1610 = vadd.f32 %v1329, %v1609
      %v1611 = vpop.f32.mrb[0].mxu0
      %v1612 = vadd.f32 %v1331, %v1611
      %1613 = vmatprep.mubr.f32.mxu0 0.0
      %1614 = vmatmul.mubr.f32.gmra.mrb[0].mxu0 %v871
      %v1615 = vpop.f32.mrb[0].mxu0
      %v1616 = vadd.f32 %v1335, %v1615
      %v1617 = vpop.f32.mrb[0].mxu0
      %v1618 = vadd.f32 %v1337, %v1617
      %1619 = vmatprep.mubr.f32.mxu0 0.0
      %1620 = vmatmul.mubr.f32.gmra.mrb[0].mxu0 %v874
      %v1621 = vpop.f32.mrb[0].mxu0
      %v1622 = vadd.f32 %v1341, %v1621
      %v1623 = vpop.f32.mrb[0].mxu0
      %v1624 = vadd.f32 %v1343, %v1623
      %1625 = vmatprep.mubr.f32.mxu0 0.0
      %1626 = vmatmul.mubr.f32.gmra.mrb[0].mxu0 %v877
      %v1627 = vpop.f32.mrb[0].mxu0
      %v1628 = vadd.f32 %v1347, %v1627
      %v1629 = vpop.f32.mrb[0].mxu0
      %v1630 = vadd.f32 %v1349, %v1629
      %1631 = vmatprep.mubr.f32.mxu0 0.0
      %1632 = vmatmul.mubr.f32.gmra.mrb[0].mxu0 %v880
      %v1633 = vpop.f32.mrb[0].mxu0
      %v1634 = vadd.f32 %v1353, %v1633
      %v1635 = vpop.f32.mrb[0].mxu0
      %v1636 = vadd.f32 %v1355, %v1635
      %1637 = vmatprep.mubr.f32.mxu0 0.0
      %1638 = vmatmul.mubr.f32.gmra.mrb[0].mxu0 %v883
      %v1639 = vpop.f32.mrb[0].mxu0
      %v1640 = vadd.f32 %v1359, %v1639
      %v1641 = vpop.f32.mrb[0].mxu0
      %v1642 = vadd.f32 %v1361, %v1641
      %1643 = vmatprep.mubr.f32.mxu0 0.0
      %1644 = vmatmul.mubr.f32.gmra.mrb[0].mxu0 %v886
      %v1645 = vpop.f32.mrb[0].mxu0
      %v1646 = vadd.f32 %v1365, %v1645
      %v1647 = vpop.f32.mrb[0].mxu0
      %v1648 = vadd.f32 %v1367, %v1647
      %1649 = vmatprep.mubr.f32.mxu0 0.0
      %1650 = vmatmul.mubr.f32.gmra.mrb[0].mxu0 %v889
      %v1651 = vpop.f32.mrb[0].mxu0
      %v1652 = vadd.f32 %v1371, %v1651
      %v1653 = vpop.f32.mrb[0].mxu0
      %v1654 = vadd.f32 %v1373, %v1653
      %1655 = vmatprep.mubr.f32.mxu0 0.0
      %1656 = vmatmul.mubr.f32.gmra.mrb[0].mxu0 %v892
      %v1657 = vpop.f32.mrb[0].mxu0
      %v1658 = vadd.f32 %v1377, %v1657
      %v1659 = vpop.f32.mrb[0].mxu0
      %v1660 = vadd.f32 %v1379, %v1659
      %1661 = vmatprep.mubr.f32.mxu0 0.0
      %1662 = vmatmul.mubr.f32.gmra.mrb[0].mxu0 %v895
      %v1663 = vpop.f32.mrb[0].mxu0
      %v1664 = vadd.f32 %v1383, %v1663
      %v1665 = vpop.f32.mrb[0].mxu0
      %v1666 = vadd.f32 %v1385, %v1665
      %1667 = vmatprep.mubr.f32.mxu0 0.0
      %1668 = vmatmul.mubr.f32.gmra.mrb[0].mxu0 %v898
      %v1669 = vpop.f32.mrb[0].mxu0
      %v1670 = vadd.f32 %v1389, %v1669
      %v1671 = vpop.f32.mrb[0].mxu0
      %v1672 = vadd.f32 %v1391, %v1671
      %1673 = vmatprep.mubr.f32.mxu0 0.0
      %1674 = vmatmul.mubr.f32.gmra.mrb[0].mxu0 %v901
      %v1675 = vpop.f32.mrb[0].mxu0
      %v1676 = vadd.f32 %v1395, %v1675
      %v1677 = vpop.f32.mrb[0].mxu0
      %v1678 = vadd.f32 %v1397, %v1677
      %1679 = vmatprep.mubr.f32.mxu0 0.0
      %1680 = vmatmul.mubr.f32.gmra.mrb[0].mxu0 %v904
      %v1681 = vpop.f32.mrb[0].mxu0
      %v1682 = vadd.f32 %v1401, %v1681
      %v1683 = vpop.f32.mrb[0].mxu0
      %v1684 = vadd.f32 %v1403, %v1683
      %1685 = vmatprep.mubr.f32.mxu0 0.0
      %1686 = vmatmul.mubr.f32.gmra.mrb[0].mxu0 %v907
      %v1687 = vpop.f32.mrb[0].mxu0
      %v1688 = vadd.f32 %v1407, %v1687
      %v1689 = vpop.f32.mrb[0].mxu0
      %v1690 = vadd.f32 %v1409, %v1689
      %1691 = vmatprep.mubr.f32.mxu0 0.0
      %1692 = vmatmul.mubr.f32.gmra.mrb[0].mxu0 %v910
      %v1693 = vpop.f32.mrb[0].mxu0
      %v1694 = vadd.f32 %v1413, %v1693
      %v1695 = vpop.f32.mrb[0].mxu0
      %v1696 = vadd.f32 %v1415, %v1695
      %1697 = vmatprep.mubr.f32.mxu0 0.0
      %1698 = vmatmul.mubr.f32.gmra.mrb[0].mxu0 %v913
      %v1699 = vpop.f32.mrb[0].mxu0
      %v1700 = vadd.f32 %v1419, %v1699
      %v1701 = vpop.f32.mrb[0].mxu0
      %v1702 = vadd.f32 %v1421, %v1701
      %1703 = vmatprep.mubr.f32.mxu0 0.0
      %1704 = vmatmul.mubr.f32.gmra.mrb[0].mxu0 %v916
      %v1705 = vpop.f32.mrb[0].mxu0
      %v1706 = vadd.f32 %v1425, %v1705
      %v1707 = vpop.f32.mrb[0].mxu0
      %v1708 = vadd.f32 %v1427, %v1707
      %1709 = vmatprep.mubr.f32.mxu0 0.0
      %1710 = vmatmul.mubr.f32.gmra.mrb[0].mxu0 %v919
      %v1711 = vpop.f32.mrb[0].mxu0
      %v1712 = vadd.f32 %v1431, %v1711
      %v1713 = vpop.f32.mrb[0].mxu0
      %v1714 = vadd.f32 %v1433, %v1713
      %1715 = vmatprep.mubr.f32.mxu0 0.0
      %1716 = vmatmul.mubr.f32.gmra.mrb[0].mxu0 %v922
      %v1717 = vpop.f32.mrb[0].mxu0
      %v1718 = vadd.f32 %v1437, %v1717
      %v1719 = vpop.f32.mrb[0].mxu0
      %v1720 = vadd.f32 %v1439, %v1719
      %1721 = vmatprep.mubr.f32.mxu0 0.0
      %1722 = vmatmul.mubr.f32.gmra.mrb[0].mxu0 %v925
      %v1723 = vpop.f32.mrb[0].mxu0
      %v1724 = vadd.f32 %v1443, %v1723
      %v1725 = vpop.f32.mrb[0].mxu0
      %v1726 = vadd.f32 %v1445, %v1725
      %1727 = vmatprep.mubr.f32.mxu0 0.0
      %1728 = vmatmul.mubr.f32.gmra.mrb[0].mxu0 %v928
      %v1729 = vpop.f32.mrb[0].mxu0
      %v1730 = vadd.f32 %v1449, %v1729
      %v1731 = vpop.f32.mrb[0].mxu0
      %v1732 = vadd.f32 %v1451, %v1731
      %1733 = vmatprep.mubr.f32.mxu0 0.0
      %1734 = vmatmul.mubr.f32.gmra.mrb[0].mxu0 %v931
      %v1735 = vpop.f32.mrb[0].mxu0
      %v1736 = vadd.f32 %v1455, %v1735
      %v1737 = vpop.f32.mrb[0].mxu0
      %v1738 = vadd.f32 %v1457, %v1737
      %1739 = vmatprep.mubr.f32.mxu0 0.0
      %1740 = vmatmul.mubr.f32.gmra.mrb[0].mxu0 %v934
      %v1741 = vpop.f32.mrb[0].mxu0
      %v1742 = vadd.f32 %v1461, %v1741
      %v1743 = vpop.f32.mrb[0].mxu0
      %v1744 = vadd.f32 %v1463, %v1743
      %1745 = vmatprep.mubr.f32.mxu0 0.0
      %1746 = vmatmul.mubr.f32.gmra.mrb[0].mxu0 %v937
      %v1747 = vpop.f32.mrb[0].mxu0
      %v1748 = vadd.f32 %v1467, %v1747
      %v1749 = vpop.f32.mrb[0].mxu0
      %v1750 = vadd.f32 %v1469, %v1749
      %1751 = vmatprep.mubr.f32.mxu0 0.0
      %1752 = vmatmul.mubr.f32.gmra.mrb[0].mxu0 %v940
      %v1753 = vpop.f32.mrb[0].mxu0
      %v1754 = vadd.f32 %v1473, %v1753
      %v1755 = vpop.f32.mrb[0].mxu0
      %v1756 = vadd.f32 %v1475, %v1755
      %1757 = vmatprep.mubr.f32.mxu0 0.0
      %1758 = vmatmul.mubr.f32.gmra.mrb[0].mxu0 %v943
      %v1759 = vpop.f32.mrb[0].mxu0
      %v1760 = vadd.f32 %v1479, %v1759
      %v1761 = vpop.f32.mrb[0].mxu0
      %v1762 = vadd.f32 %v1481, %v1761
      %1763 = vmatprep.mubr.f32.mxu0 0.0
      %1764 = vmatmul.mubr.f32.gmra.mrb[0].mxu0 %v946
      %v1765 = vpop.f32.mrb[0].mxu0
      %v1766 = vadd.f32 %v1485, %v1765
      %v1767 = vpop.f32.mrb[0].mxu0
      %v1768 = vadd.f32 %v1487, %v1767
      %1769 = vmatprep.mubr.f32.mxu0 0.0
      %1770 = vmatmul.mubr.f32.gmra.mrb[0].mxu0 %v949
      %v1771 = vpop.f32.mrb[0].mxu0
      %v1772 = vadd.f32 %v1491, %v1771
      %v1773 = vpop.f32.mrb[0].mxu0
      %v1774 = vadd.f32 %v1493, %v1773
      %1775 = vmatprep.mubr.f32.mxu0 0.0
      %1776 = vmatmul.mubr.f32.gmra.mrb[0].mxu0 %v952
      %v1777 = vpop.f32.mrb[0].mxu0
      %v1778 = vadd.f32 %v1497, %v1777
      %v1779 = vpop.f32.mrb[0].mxu0
      %v1780 = vadd.f32 %v1499, %v1779
      %1781 = vmatprep.mubr.f32.mxu0 0.0
      %1782 = vmatmul.mubr.f32.gmra.mrb[0].mxu0 %v955
      %v1783 = vpop.f32.mrb[0].mxu0
      %v1784 = vadd.f32 %v1503, %v1783
      %v1785 = vpop.f32.mrb[0].mxu0
      %v1786 = vadd.f32 %v1505, %v1785
      %1787 = vmatprep.mubr.f32.mxu0 0.0
      %1788 = vmatmul.mubr.f32.gmra.mrb[0].mxu0 %v958
      %v1789 = vpop.f32.mrb[0].mxu0
      %v1790 = vadd.f32 %v1509, %v1789
      %v1791 = vpop.f32.mrb[0].mxu0
      %v1792 = vadd.f32 %v1511, %v1791
      %1793 = vmatprep.mubr.f32.mxu0 0.0
      %1794 = vmatmul.mubr.f32.gmra.mrb[0].mxu0 %v961
      %v1795 = vpop.f32.mrb[0].mxu0
      %v1796 = vadd.f32 %v1515, %v1795
      %v1797 = vpop.f32.mrb[0].mxu0
      %v1798 = vadd.f32 %v1517, %v1797
      %1799 = vmatprep.mubr.f32.mxu0 0.0
      %1800 = vmatmul.mubr.f32.gmra.mrb[0].mxu0 %v964
      %v1801 = vpop.f32.mrb[0].mxu0
      %v1802 = vadd.f32 %v1521, %v1801
      %v1803 = vpop.f32.mrb[0].mxu0
      %v1804 = vadd.f32 %v1523, %v1803
      %1805 = vmatprep.mubr.f32.mxu0 0.0
      %1806 = vmatmul.mubr.f32.gmra.mrb[0].mxu0 %v967
      %v1807 = vpop.f32.mrb[0].mxu0
      %v1808 = vadd.f32 %v1527, %v1807
      %v1809 = vpop.f32.mrb[0].mxu0
      %v1810 = vadd.f32 %v1529, %v1809
      %1811 = vdwg.mxu0
      %v1812 = vld [vmem:[%s307] sm:$0xff]
      %v1813 = vld [vmem:[%s307 + $0x8] sm:$0xff]
      %v1814 = vld [vmem:[%s307 + $0x10] sm:$0xff]
      %v1815 = vld [vmem:[%s307 + $0x18] sm:$0xff]
      %v1816 = vld [vmem:[%s307 + $0x20] sm:$0xff]
      %v1817 = vld [vmem:[%s307 + $0x28] sm:$0xff]
      %v1818 = vld [vmem:[%s307 + $0x30] sm:$0xff]
      %v1819 = vld [vmem:[%s307 + $0x38] sm:$0xff]
      %v1820 = vld [vmem:[%s307 + $0x40] sm:$0xff]
      %v1821 = vld [vmem:[%s307 + $0x48] sm:$0xff]
      %v1822 = vld [vmem:[%s307 + $0x50] sm:$0xff]
      %v1823 = vld [vmem:[%s307 + $0x58] sm:$0xff]
      %v1824 = vld [vmem:[%s307 + $0x60] sm:$0xff]
      %v1825 = vld [vmem:[%s307 + $0x68] sm:$0xff]
      %v1826 = vld [vmem:[%s307 + $0x70] sm:$0xff]
      %v1827 = vld [vmem:[%s307 + $0x78] sm:$0xff]
      %v1828 = vld [vmem:[%s307 + $0x80] sm:$0xff]
      %v1829 = vld [vmem:[%s307 + $0x88] sm:$0xff]
      %v1830 = vld [vmem:[%s307 + $0x90] sm:$0xff]
      %v1831 = vld [vmem:[%s307 + $0x98] sm:$0xff]
      %v1832 = vld [vmem:[%s307 + $0xa0] sm:$0xff]
      %v1833 = vld [vmem:[%s307 + $0xa8] sm:$0xff]
      %v1834 = vld [vmem:[%s307 + $0xb0] sm:$0xff]
      %v1835 = vld [vmem:[%s307 + $0xb8] sm:$0xff]
      %v1836 = vld [vmem:[%s307 + $0xc0] sm:$0xff]
      %v1837 = vld [vmem:[%s307 + $0xc8] sm:$0xff]
      %v1838 = vld [vmem:[%s307 + $0xd0] sm:$0xff]
      %v1839 = vld [vmem:[%s307 + $0xd8] sm:$0xff]
      %v1840 = vld [vmem:[%s307 + $0xe0] sm:$0xff]
      %v1841 = vld [vmem:[%s307 + $0xe8] sm:$0xff]
      %v1842 = vld [vmem:[%s307 + $0xf0] sm:$0xff]
      %v1843 = vld [vmem:[%s307 + $0xf8] sm:$0xff]
      %v1844 = vld [vmem:[%s307 + $0x100] sm:$0xff]
      %v1845 = vld [vmem:[%s307 + $0x108] sm:$0xff]
      %v1846 = vld [vmem:[%s307 + $0x110] sm:$0xff]
      %v1847 = vld [vmem:[%s307 + $0x118] sm:$0xff]
      %1849 = vset.pattern.permute.xlu0 0
      %1850 = vperm.xlu0 %1849, %v1812
      %v1851 = vpop.permute.xlu0 %1850
      %1854 = vset.pattern.permute.xlu0 0
      %1855 = vperm.xlu0 %1854, %v1813
      %v1856 = vpop.permute.xlu0 %1855
      %1859 = vset.pattern.permute.xlu0 0
      %1860 = vperm.xlu0 %1859, %v1814
      %v1861 = vpop.permute.xlu0 %1860
      %1864 = vset.pattern.permute.xlu0 0
      %1865 = vperm.xlu0 %1864, %v1815
      %v1866 = vpop.permute.xlu0 %1865
      %1869 = vset.pattern.permute.xlu0 0
      %1870 = vperm.xlu0 %1869, %v1816
      %v1871 = vpop.permute.xlu0 %1870
      %1874 = vset.pattern.permute.xlu0 0
      %1875 = vperm.xlu0 %1874, %v1817
      %v1876 = vpop.permute.xlu0 %1875
      %1879 = vset.pattern.permute.xlu0 0
      %1880 = vperm.xlu0 %1879, %v1818
      %v1881 = vpop.permute.xlu0 %1880
      %1884 = vset.pattern.permute.xlu0 0
      %1885 = vperm.xlu0 %1884, %v1819
      %v1886 = vpop.permute.xlu0 %1885
      %1889 = vset.pattern.permute.xlu0 0
      %1890 = vperm.xlu0 %1889, %v1820
      %v1891 = vpop.permute.xlu0 %1890
      %1894 = vset.pattern.permute.xlu0 0
      %1895 = vperm.xlu0 %1894, %v1821
      %v1896 = vpop.permute.xlu0 %1895
      %1899 = vset.pattern.permute.xlu0 0
      %1900 = vperm.xlu0 %1899, %v1822
      %v1901 = vpop.permute.xlu0 %1900
      %1904 = vset.pattern.permute.xlu0 0
      %1905 = vperm.xlu0 %1904, %v1823
      %v1906 = vpop.permute.xlu0 %1905
      %1909 = vset.pattern.permute.xlu0 0
      %1910 = vperm.xlu0 %1909, %v1824
      %v1911 = vpop.permute.xlu0 %1910
      %1914 = vset.pattern.permute.xlu0 0
      %1915 = vperm.xlu0 %1914, %v1825
      %v1916 = vpop.permute.xlu0 %1915
      %1919 = vset.pattern.permute.xlu0 0
      %1920 = vperm.xlu0 %1919, %v1826
      %v1921 = vpop.permute.xlu0 %1920
      %1924 = vset.pattern.permute.xlu0 0
      %1925 = vperm.xlu0 %1924, %v1827
      %v1926 = vpop.permute.xlu0 %1925
      %1929 = vset.pattern.permute.xlu0 0
      %1930 = vperm.xlu0 %1929, %v1828
      %v1931 = vpop.permute.xlu0 %1930
      %1934 = vset.pattern.permute.xlu0 0
      %1935 = vperm.xlu0 %1934, %v1829
      %v1936 = vpop.permute.xlu0 %1935
      %1939 = vset.pattern.permute.xlu0 0
      %1940 = vperm.xlu0 %1939, %v1830
      %v1941 = vpop.permute.xlu0 %1940
      %1944 = vset.pattern.permute.xlu0 0
      %1945 = vperm.xlu0 %1944, %v1831
      %v1946 = vpop.permute.xlu0 %1945
      %1949 = vset.pattern.permute.xlu0 0
      %1950 = vperm.xlu0 %1949, %v1832
      %v1951 = vpop.permute.xlu0 %1950
      %1954 = vset.pattern.permute.xlu0 0
      %1955 = vperm.xlu0 %1954, %v1833
      %v1956 = vpop.permute.xlu0 %1955
      %1959 = vset.pattern.permute.xlu0 0
      %1960 = vperm.xlu0 %1959, %v1834
      %v1961 = vpop.permute.xlu0 %1960
      %1964 = vset.pattern.permute.xlu0 0
      %1965 = vperm.xlu0 %1964, %v1835
      %v1966 = vpop.permute.xlu0 %1965
      %1969 = vset.pattern.permute.xlu0 0
      %1970 = vperm.xlu0 %1969, %v1836
      %v1971 = vpop.permute.xlu0 %1970
      %1974 = vset.pattern.permute.xlu0 0
      %1975 = vperm.xlu0 %1974, %v1837
      %v1976 = vpop.permute.xlu0 %1975
      %1979 = vset.pattern.permute.xlu0 0
      %1980 = vperm.xlu0 %1979, %v1838
      %v1981 = vpop.permute.xlu0 %1980
      %1984 = vset.pattern.permute.xlu0 0
      %1985 = vperm.xlu0 %1984, %v1839
      %v1986 = vpop.permute.xlu0 %1985
      %1989 = vset.pattern.permute.xlu0 0
      %1990 = vperm.xlu0 %1989, %v1840
      %v1991 = vpop.permute.xlu0 %1990
      %1994 = vset.pattern.permute.xlu0 0
      %1995 = vperm.xlu0 %1994, %v1841
      %v1996 = vpop.permute.xlu0 %1995
      %1999 = vset.pattern.permute.xlu0 0
      %2000 = vperm.xlu0 %1999, %v1842
      %v2001 = vpop.permute.xlu0 %2000
      %2004 = vset.pattern.permute.xlu0 0
      %2005 = vperm.xlu0 %2004, %v1843
      %v2006 = vpop.permute.xlu0 %2005
      %2009 = vset.pattern.permute.xlu0 0
      %2010 = vperm.xlu0 %2009, %v1844
      %v2011 = vpop.permute.xlu0 %2010
      %2014 = vset.pattern.permute.xlu0 0
      %2015 = vperm.xlu0 %2014, %v1845
      %v2016 = vpop.permute.xlu0 %2015
      %2019 = vset.pattern.permute.xlu0 0
      %2020 = vperm.xlu0 %2019, %v1846
      %v2021 = vpop.permute.xlu0 %2020
      %2024 = vset.pattern.permute.xlu0 0
      %2025 = vperm.xlu0 %2024, %v1847
      %v2026 = vpop.permute.xlu0 %2025
      %v2028 = vmul.f32 %v1598, %v1851
      %v2029 = vmul.f32 %v1600, %v1851
      %v2030 = vmul.f32 %v1604, %v1856
      %v2031 = vmul.f32 %v1606, %v1856
      %v2032 = vmul.f32 %v1610, %v1861
      %v2033 = vmul.f32 %v1612, %v1861
      %v2034 = vmul.f32 %v1616, %v1866
      %v2035 = vmul.f32 %v1618, %v1866
      %v2036 = vmul.f32 %v1622, %v1871
      %v2037 = vmul.f32 %v1624, %v1871
      %v2038 = vmul.f32 %v1628, %v1876
      %v2039 = vmul.f32 %v1630, %v1876
      %v2040 = vmul.f32 %v1634, %v1881
      %v2041 = vmul.f32 %v1636, %v1881
      %v2042 = vmul.f32 %v1640, %v1886
      %v2043 = vmul.f32 %v1642, %v1886
      %v2044 = vmul.f32 %v1646, %v1891
      %v2045 = vmul.f32 %v1648, %v1891
      %v2046 = vmul.f32 %v1652, %v1896
      %v2047 = vmul.f32 %v1654, %v1896
      %v2048 = vmul.f32 %v1658, %v1901
      %v2049 = vmul.f32 %v1660, %v1901
      %v2050 = vmul.f32 %v1664, %v1906
      %v2051 = vmul.f32 %v1666, %v1906
      %v2052 = vmul.f32 %v1670, %v1911
      %v2053 = vmul.f32 %v1672, %v1911
      %v2054 = vmul.f32 %v1676, %v1916
      %v2055 = vmul.f32 %v1678, %v1916
      %v2056 = vmul.f32 %v1682, %v1921
      %v2057 = vmul.f32 %v1684, %v1921
      %v2058 = vmul.f32 %v1688, %v1926
      %v2059 = vmul.f32 %v1690, %v1926
      %v2060 = vmul.f32 %v1694, %v1931
      %v2061 = vmul.f32 %v1696, %v1931
      %v2062 = vmul.f32 %v1700, %v1936
      %v2063 = vmul.f32 %v1702, %v1936
      %v2064 = vmul.f32 %v1706, %v1941
      %v2065 = vmul.f32 %v1708, %v1941
      %v2066 = vmul.f32 %v1712, %v1946
      %v2067 = vmul.f32 %v1714, %v1946
      %v2068 = vmul.f32 %v1718, %v1951
      %v2069 = vmul.f32 %v1720, %v1951
      %v2070 = vmul.f32 %v1724, %v1956
      %v2071 = vmul.f32 %v1726, %v1956
      %v2072 = vmul.f32 %v1730, %v1961
      %v2073 = vmul.f32 %v1732, %v1961
      %v2074 = vmul.f32 %v1736, %v1966
      %v2075 = vmul.f32 %v1738, %v1966
      %v2076 = vmul.f32 %v1742, %v1971
      %v2077 = vmul.f32 %v1744, %v1971
      %v2078 = vmul.f32 %v1748, %v1976
      %v2079 = vmul.f32 %v1750, %v1976
      %v2080 = vmul.f32 %v1754, %v1981
      %v2081 = vmul.f32 %v1756, %v1981
      %v2082 = vmul.f32 %v1760, %v1986
      %v2083 = vmul.f32 %v1762, %v1986
      %v2084 = vmul.f32 %v1766, %v1991
      %v2085 = vmul.f32 %v1768, %v1991
      %v2086 = vmul.f32 %v1772, %v1996
      %v2087 = vmul.f32 %v1774, %v1996
      %v2088 = vmul.f32 %v1778, %v2001
      %v2089 = vmul.f32 %v1780, %v2001
      %v2090 = vmul.f32 %v1784, %v2006
      %v2091 = vmul.f32 %v1786, %v2006
      %v2092 = vmul.f32 %v1790, %v2011
      %v2093 = vmul.f32 %v1792, %v2011
      %v2094 = vmul.f32 %v1796, %v2016
      %v2095 = vmul.f32 %v1798, %v2016
      %v2096 = vmul.f32 %v1802, %v2021
      %v2097 = vmul.f32 %v1804, %v2021
      %v2098 = vmul.f32 %v1808, %v2026
      %v2099 = vmul.f32 %v1810, %v2026
      %v2100 = vld [vmem:[%s313] sm:$0xff]
      %v2101 = vld [vmem:[%s313 + $0x8] sm:$0xff]
      %v2102 = vld [vmem:[%s313 + $0x10] sm:$0xff]
      %v2103 = vld [vmem:[%s313 + $0x18] sm:$0xff]
      %v2104 = vld [vmem:[%s313 + $0x20] sm:$0xff]
      %v2105 = vld [vmem:[%s313 + $0x28] sm:$0xff]
      %v2106 = vld [vmem:[%s313 + $0x30] sm:$0xff]
      %v2107 = vld [vmem:[%s313 + $0x38] sm:$0xff]
      %v2108 = vld [vmem:[%s313 + $0x40] sm:$0xff]
      %v2109 = vld [vmem:[%s313 + $0x48] sm:$0xff]
      %v2110 = vld [vmem:[%s313 + $0x50] sm:$0xff]
      %v2111 = vld [vmem:[%s313 + $0x58] sm:$0xff]
      %v2112 = vld [vmem:[%s313 + $0x60] sm:$0xff]
      %v2113 = vld [vmem:[%s313 + $0x68] sm:$0xff]
      %v2114 = vld [vmem:[%s313 + $0x70] sm:$0xff]
      %v2115 = vld [vmem:[%s313 + $0x78] sm:$0xff]
      %v2116 = vld [vmem:[%s313 + $0x80] sm:$0xff]
      %v2117 = vld [vmem:[%s313 + $0x88] sm:$0xff]
      %v2118 = vld [vmem:[%s313 + $0x90] sm:$0xff]
      %v2119 = vld [vmem:[%s313 + $0x98] sm:$0xff]
      %v2120 = vld [vmem:[%s313 + $0xa0] sm:$0xff]
      %v2121 = vld [vmem:[%s313 + $0xa8] sm:$0xff]
      %v2122 = vld [vmem:[%s313 + $0xb0] sm:$0xff]
      %v2123 = vld [vmem:[%s313 + $0xb8] sm:$0xff]
      %v2124 = vld [vmem:[%s313 + $0xc0] sm:$0xff]
      %v2125 = vld [vmem:[%s313 + $0xc8] sm:$0xff]
      %v2126 = vld [vmem:[%s313 + $0xd0] sm:$0xff]
      %v2127 = vld [vmem:[%s313 + $0xd8] sm:$0xff]
      %v2128 = vld [vmem:[%s313 + $0xe0] sm:$0xff]
      %v2129 = vld [vmem:[%s313 + $0xe8] sm:$0xff]
      %v2130 = vld [vmem:[%s313 + $0xf0] sm:$0xff]
      %v2131 = vld [vmem:[%s313 + $0xf8] sm:$0xff]
      %v2132 = vld [vmem:[%s313 + $0x100] sm:$0xff]
      %v2133 = vld [vmem:[%s313 + $0x108] sm:$0xff]
      %v2134 = vld [vmem:[%s313 + $0x110] sm:$0xff]
      %v2135 = vld [vmem:[%s313 + $0x118] sm:$0xff]
      %2137 = vset.pattern.permute.xlu0 0
      %2138 = vperm.xlu0 %2137, %v2100
      %v2139 = vpop.permute.xlu0 %2138
      %2142 = vset.pattern.permute.xlu0 0
      %2143 = vperm.xlu0 %2142, %v2101
      %v2144 = vpop.permute.xlu0 %2143
      %2147 = vset.pattern.permute.xlu0 0
      %2148 = vperm.xlu0 %2147, %v2102
      %v2149 = vpop.permute.xlu0 %2148
      %2152 = vset.pattern.permute.xlu0 0
      %2153 = vperm.xlu0 %2152, %v2103
      %v2154 = vpop.permute.xlu0 %2153
      %2157 = vset.pattern.permute.xlu0 0
      %2158 = vperm.xlu0 %2157, %v2104
      %v2159 = vpop.permute.xlu0 %2158
      %2162 = vset.pattern.permute.xlu0 0
      %2163 = vperm.xlu0 %2162, %v2105
      %v2164 = vpop.permute.xlu0 %2163
      %2167 = vset.pattern.permute.xlu0 0
      %2168 = vperm.xlu0 %2167, %v2106
      %v2169 = vpop.permute.xlu0 %2168
      %2172 = vset.pattern.permute.xlu0 0
      %2173 = vperm.xlu0 %2172, %v2107
      %v2174 = vpop.permute.xlu0 %2173
      %2177 = vset.pattern.permute.xlu0 0
      %2178 = vperm.xlu0 %2177, %v2108
      %v2179 = vpop.permute.xlu0 %2178
      %2182 = vset.pattern.permute.xlu0 0
      %2183 = vperm.xlu0 %2182, %v2109
      %v2184 = vpop.permute.xlu0 %2183
      %2187 = vset.pattern.permute.xlu0 0
      %2188 = vperm.xlu0 %2187, %v2110
      %v2189 = vpop.permute.xlu0 %2188
      %2192 = vset.pattern.permute.xlu0 0
      %2193 = vperm.xlu0 %2192, %v2111
      %v2194 = vpop.permute.xlu0 %2193
      %2197 = vset.pattern.permute.xlu0 0
      %2198 = vperm.xlu0 %2197, %v2112
      %v2199 = vpop.permute.xlu0 %2198
      %2202 = vset.pattern.permute.xlu0 0
      %2203 = vperm.xlu0 %2202, %v2113
      %v2204 = vpop.permute.xlu0 %2203
      %2207 = vset.pattern.permute.xlu0 0
      %2208 = vperm.xlu0 %2207, %v2114
      %v2209 = vpop.permute.xlu0 %2208
      %2212 = vset.pattern.permute.xlu0 0
      %2213 = vperm.xlu0 %2212, %v2115
      %v2214 = vpop.permute.xlu0 %2213
      %2217 = vset.pattern.permute.xlu0 0
      %2218 = vperm.xlu0 %2217, %v2116
      %v2219 = vpop.permute.xlu0 %2218
      %2222 = vset.pattern.permute.xlu0 0
      %2223 = vperm.xlu0 %2222, %v2117
      %v2224 = vpop.permute.xlu0 %2223
      %2227 = vset.pattern.permute.xlu0 0
      %2228 = vperm.xlu0 %2227, %v2118
      %v2229 = vpop.permute.xlu0 %2228
      %2232 = vset.pattern.permute.xlu0 0
      %2233 = vperm.xlu0 %2232, %v2119
      %v2234 = vpop.permute.xlu0 %2233
      %2237 = vset.pattern.permute.xlu0 0
      %2238 = vperm.xlu0 %2237, %v2120
      %v2239 = vpop.permute.xlu0 %2238
      %2242 = vset.pattern.permute.xlu0 0
      %2243 = vperm.xlu0 %2242, %v2121
      %v2244 = vpop.permute.xlu0 %2243
      %2247 = vset.pattern.permute.xlu0 0
      %2248 = vperm.xlu0 %2247, %v2122
      %v2249 = vpop.permute.xlu0 %2248
      %2252 = vset.pattern.permute.xlu0 0
      %2253 = vperm.xlu0 %2252, %v2123
      %v2254 = vpop.permute.xlu0 %2253
      %2257 = vset.pattern.permute.xlu0 0
      %2258 = vperm.xlu0 %2257, %v2124
      %v2259 = vpop.permute.xlu0 %2258
      %2262 = vset.pattern.permute.xlu0 0
      %2263 = vperm.xlu0 %2262, %v2125
      %v2264 = vpop.permute.xlu0 %2263
      %2267 = vset.pattern.permute.xlu0 0
      %2268 = vperm.xlu0 %2267, %v2126
      %v2269 = vpop.permute.xlu0 %2268
      %2272 = vset.pattern.permute.xlu0 0
      %2273 = vperm.xlu0 %2272, %v2127
      %v2274 = vpop.permute.xlu0 %2273
      %2277 = vset.pattern.permute.xlu0 0
      %2278 = vperm.xlu0 %2277, %v2128
      %v2279 = vpop.permute.xlu0 %2278
      %2282 = vset.pattern.permute.xlu0 0
      %2283 = vperm.xlu0 %2282, %v2129
      %v2284 = vpop.permute.xlu0 %2283
      %2287 = vset.pattern.permute.xlu0 0
      %2288 = vperm.xlu0 %2287, %v2130
      %v2289 = vpop.permute.xlu0 %2288
      %2292 = vset.pattern.permute.xlu0 0
      %2293 = vperm.xlu0 %2292, %v2131
      %v2294 = vpop.permute.xlu0 %2293
      %2297 = vset.pattern.permute.xlu0 0
      %2298 = vperm.xlu0 %2297, %v2132
      %v2299 = vpop.permute.xlu0 %2298
      %2302 = vset.pattern.permute.xlu0 0
      %2303 = vperm.xlu0 %2302, %v2133
      %v2304 = vpop.permute.xlu0 %2303
      %2307 = vset.pattern.permute.xlu0 0
      %2308 = vperm.xlu0 %2307, %v2134
      %v2309 = vpop.permute.xlu0 %2308
      %2312 = vset.pattern.permute.xlu0 0
      %2313 = vperm.xlu0 %2312, %v2135
      %v2314 = vpop.permute.xlu0 %2313
      %v2316 = vadd.f32 %v2028, %v2139
      %v2317 = vadd.f32 %v2029, %v2139
      %v2318 = vadd.f32 %v2030, %v2144
      %v2319 = vadd.f32 %v2031, %v2144
      %v2320 = vadd.f32 %v2032, %v2149
      %v2321 = vadd.f32 %v2033, %v2149
      %v2322 = vadd.f32 %v2034, %v2154
      %v2323 = vadd.f32 %v2035, %v2154
      %v2324 = vadd.f32 %v2036, %v2159
      %v2325 = vadd.f32 %v2037, %v2159
      %v2326 = vadd.f32 %v2038, %v2164
      %v2327 = vadd.f32 %v2039, %v2164
      %v2328 = vadd.f32 %v2040, %v2169
      %v2329 = vadd.f32 %v2041, %v2169
      %v2330 = vadd.f32 %v2042, %v2174
      %v2331 = vadd.f32 %v2043, %v2174
      %v2332 = vadd.f32 %v2044, %v2179
      %v2333 = vadd.f32 %v2045, %v2179
      %v2334 = vadd.f32 %v2046, %v2184
      %v2335 = vadd.f32 %v2047, %v2184
      %v2336 = vadd.f32 %v2048, %v2189
      %v2337 = vadd.f32 %v2049, %v2189
      %v2338 = vadd.f32 %v2050, %v2194
      %v2339 = vadd.f32 %v2051, %v2194
      %v2340 = vadd.f32 %v2052, %v2199
      %v2341 = vadd.f32 %v2053, %v2199
      %v2342 = vadd.f32 %v2054, %v2204
      %v2343 = vadd.f32 %v2055, %v2204
      %v2344 = vadd.f32 %v2056, %v2209
      %v2345 = vadd.f32 %v2057, %v2209
      %v2346 = vadd.f32 %v2058, %v2214
      %v2347 = vadd.f32 %v2059, %v2214
      %v2348 = vadd.f32 %v2060, %v2219
      %v2349 = vadd.f32 %v2061, %v2219
      %v2350 = vadd.f32 %v2062, %v2224
      %v2351 = vadd.f32 %v2063, %v2224
      %v2352 = vadd.f32 %v2064, %v2229
      %v2353 = vadd.f32 %v2065, %v2229
      %v2354 = vadd.f32 %v2066, %v2234
      %v2355 = vadd.f32 %v2067, %v2234
      %v2356 = vadd.f32 %v2068, %v2239
      %v2357 = vadd.f32 %v2069, %v2239
      %v2358 = vadd.f32 %v2070, %v2244
      %v2359 = vadd.f32 %v2071, %v2244
      %v2360 = vadd.f32 %v2072, %v2249
      %v2361 = vadd.f32 %v2073, %v2249
      %v2362 = vadd.f32 %v2074, %v2254
      %v2363 = vadd.f32 %v2075, %v2254
      %v2364 = vadd.f32 %v2076, %v2259
      %v2365 = vadd.f32 %v2077, %v2259
      %v2366 = vadd.f32 %v2078, %v2264
      %v2367 = vadd.f32 %v2079, %v2264
      %v2368 = vadd.f32 %v2080, %v2269
      %v2369 = vadd.f32 %v2081, %v2269
      %v2370 = vadd.f32 %v2082, %v2274
      %v2371 = vadd.f32 %v2083, %v2274
      %v2372 = vadd.f32 %v2084, %v2279
      %v2373 = vadd.f32 %v2085, %v2279
      %v2374 = vadd.f32 %v2086, %v2284
      %v2375 = vadd.f32 %v2087, %v2284
      %v2376 = vadd.f32 %v2088, %v2289
      %v2377 = vadd.f32 %v2089, %v2289
      %v2378 = vadd.f32 %v2090, %v2294
      %v2379 = vadd.f32 %v2091, %v2294
      %v2380 = vadd.f32 %v2092, %v2299
      %v2381 = vadd.f32 %v2093, %v2299
      %v2382 = vadd.f32 %v2094, %v2304
      %v2383 = vadd.f32 %v2095, %v2304
      %v2384 = vadd.f32 %v2096, %v2309
      %v2385 = vadd.f32 %v2097, %v2309
      %v2386 = vadd.f32 %v2098, %v2314
      %v2387 = vadd.f32 %v2099, %v2314
      %v2388 = vld [vmem:[%s320] sm:$0xff]
      %v2389 = vld [vmem:[%s320 + $0x8] sm:$0xff]
      %v2390 = vld [vmem:[%s320 + $0x10] sm:$0xff]
      %v2391 = vld [vmem:[%s320 + $0x18] sm:$0xff]
      %v2392 = vld [vmem:[%s320 + $0x20] sm:$0xff]
      %v2393 = vld [vmem:[%s320 + $0x28] sm:$0xff]
      %v2394 = vld [vmem:[%s320 + $0x30] sm:$0xff]
      %v2395 = vld [vmem:[%s320 + $0x38] sm:$0xff]
      %v2396 = vld [vmem:[%s320 + $0x40] sm:$0xff]
      %v2397 = vld [vmem:[%s320 + $0x48] sm:$0xff]
      %v2398 = vld [vmem:[%s320 + $0x50] sm:$0xff]
      %v2399 = vld [vmem:[%s320 + $0x58] sm:$0xff]
      %v2400 = vld [vmem:[%s320 + $0x60] sm:$0xff]
      %v2401 = vld [vmem:[%s320 + $0x68] sm:$0xff]
      %v2402 = vld [vmem:[%s320 + $0x70] sm:$0xff]
      %v2403 = vld [vmem:[%s320 + $0x78] sm:$0xff]
      %v2404 = vld [vmem:[%s320 + $0x80] sm:$0xff]
      %v2405 = vld [vmem:[%s320 + $0x88] sm:$0xff]
      %v2406 = vld [vmem:[%s320 + $0x90] sm:$0xff]
      %v2407 = vld [vmem:[%s320 + $0x98] sm:$0xff]
      %v2408 = vld [vmem:[%s320 + $0xa0] sm:$0xff]
      %v2409 = vld [vmem:[%s320 + $0xa8] sm:$0xff]
      %v2410 = vld [vmem:[%s320 + $0xb0] sm:$0xff]
      %v2411 = vld [vmem:[%s320 + $0xb8] sm:$0xff]
      %v2412 = vld [vmem:[%s320 + $0xc0] sm:$0xff]
      %v2413 = vld [vmem:[%s320 + $0xc8] sm:$0xff]
      %v2414 = vld [vmem:[%s320 + $0xd0] sm:$0xff]
      %v2415 = vld [vmem:[%s320 + $0xd8] sm:$0xff]
      %v2416 = vld [vmem:[%s320 + $0xe0] sm:$0xff]
      %v2417 = vld [vmem:[%s320 + $0xe8] sm:$0xff]
      %v2418 = vld [vmem:[%s320 + $0xf0] sm:$0xff]
      %v2419 = vld [vmem:[%s320 + $0xf8] sm:$0xff]
      %v2420 = vld [vmem:[%s320 + $0x100] sm:$0xff]
      %v2421 = vld [vmem:[%s320 + $0x108] sm:$0xff]
      %v2422 = vld [vmem:[%s320 + $0x110] sm:$0xff]
      %v2423 = vld [vmem:[%s320 + $0x118] sm:$0xff]
      %v2424 = vld [vmem:[%s320 + $0x120] sm:$0xff]
      %v2425 = vld [vmem:[%s320 + $0x128] sm:$0xff]
      %v2426 = vld [vmem:[%s320 + $0x130] sm:$0xff]
      %v2427 = vld [vmem:[%s320 + $0x138] sm:$0xff]
      %v2428 = vld [vmem:[%s320 + $0x140] sm:$0xff]
      %v2429 = vld [vmem:[%s320 + $0x148] sm:$0xff]
      %v2430 = vld [vmem:[%s320 + $0x150] sm:$0xff]
      %v2431 = vld [vmem:[%s320 + $0x158] sm:$0xff]
      %v2432 = vld [vmem:[%s320 + $0x160] sm:$0xff]
      %v2433 = vld [vmem:[%s320 + $0x168] sm:$0xff]
      %v2434 = vld [vmem:[%s320 + $0x170] sm:$0xff]
      %v2435 = vld [vmem:[%s320 + $0x178] sm:$0xff]
      %v2436 = vld [vmem:[%s320 + $0x180] sm:$0xff]
      %v2437 = vld [vmem:[%s320 + $0x188] sm:$0xff]
      %v2438 = vld [vmem:[%s320 + $0x190] sm:$0xff]
      %v2439 = vld [vmem:[%s320 + $0x198] sm:$0xff]
      %v2440 = vld [vmem:[%s320 + $0x1a0] sm:$0xff]
      %v2441 = vld [vmem:[%s320 + $0x1a8] sm:$0xff]
      %v2442 = vld [vmem:[%s320 + $0x1b0] sm:$0xff]
      %v2443 = vld [vmem:[%s320 + $0x1b8] sm:$0xff]
      %v2444 = vld [vmem:[%s320 + $0x1c0] sm:$0xff]
      %v2445 = vld [vmem:[%s320 + $0x1c8] sm:$0xff]
      %v2446 = vld [vmem:[%s320 + $0x1d0] sm:$0xff]
      %v2447 = vld [vmem:[%s320 + $0x1d8] sm:$0xff]
      %v2448 = vld [vmem:[%s320 + $0x1e0] sm:$0xff]
      %v2449 = vld [vmem:[%s320 + $0x1e8] sm:$0xff]
      %v2450 = vld [vmem:[%s320 + $0x1f0] sm:$0xff]
      %v2451 = vld [vmem:[%s320 + $0x1f8] sm:$0xff]
      %v2452 = vld [vmem:[%s320 + $0x200] sm:$0xff]
      %v2453 = vld [vmem:[%s320 + $0x208] sm:$0xff]
      %v2454 = vld [vmem:[%s320 + $0x210] sm:$0xff]
      %v2455 = vld [vmem:[%s320 + $0x218] sm:$0xff]
      %v2456 = vld [vmem:[%s320 + $0x220] sm:$0xff]
      %v2457 = vld [vmem:[%s320 + $0x228] sm:$0xff]
      %v2458 = vld [vmem:[%s320 + $0x230] sm:$0xff]
      %v2459 = vld [vmem:[%s320 + $0x238] sm:$0xff]
      %v2460 = vadd.f32 %v2316, %v2388
      %v2461 = vadd.f32 %v2317, %v2389
      %v2462 = vadd.f32 %v2318, %v2390
      %v2463 = vadd.f32 %v2319, %v2391
      %v2464 = vadd.f32 %v2320, %v2392
      %v2465 = vadd.f32 %v2321, %v2393
      %v2466 = vadd.f32 %v2322, %v2394
      %v2467 = vadd.f32 %v2323, %v2395
      %v2468 = vadd.f32 %v2324, %v2396
      %v2469 = vadd.f32 %v2325, %v2397
      %v2470 = vadd.f32 %v2326, %v2398
      %v2471 = vadd.f32 %v2327, %v2399
      %v2472 = vadd.f32 %v2328, %v2400
      %v2473 = vadd.f32 %v2329, %v2401
      %v2474 = vadd.f32 %v2330, %v2402
      %v2475 = vadd.f32 %v2331, %v2403
      %v2476 = vadd.f32 %v2332, %v2404
      %v2477 = vadd.f32 %v2333, %v2405
      %v2478 = vadd.f32 %v2334, %v2406
      %v2479 = vadd.f32 %v2335, %v2407
      %v2480 = vadd.f32 %v2336, %v2408
      %v2481 = vadd.f32 %v2337, %v2409
      %v2482 = vadd.f32 %v2338, %v2410
      %v2483 = vadd.f32 %v2339, %v2411
      %v2484 = vadd.f32 %v2340, %v2412
      %v2485 = vadd.f32 %v2341, %v2413
      %v2486 = vadd.f32 %v2342, %v2414
      %v2487 = vadd.f32 %v2343, %v2415
      %v2488 = vadd.f32 %v2344, %v2416
      %v2489 = vadd.f32 %v2345, %v2417
      %v2490 = vadd.f32 %v2346, %v2418
      %v2491 = vadd.f32 %v2347, %v2419
      %v2492 = vadd.f32 %v2348, %v2420
      %v2493 = vadd.f32 %v2349, %v2421
      %v2494 = vadd.f32 %v2350, %v2422
      %v2495 = vadd.f32 %v2351, %v2423
      %v2496 = vadd.f32 %v2352, %v2424
      %v2497 = vadd.f32 %v2353, %v2425
      %v2498 = vadd.f32 %v2354, %v2426
      %v2499 = vadd.f32 %v2355, %v2427
      %v2500 = vadd.f32 %v2356, %v2428
      %v2501 = vadd.f32 %v2357, %v2429
      %v2502 = vadd.f32 %v2358, %v2430
      %v2503 = vadd.f32 %v2359, %v2431
      %v2504 = vadd.f32 %v2360, %v2432
      %v2505 = vadd.f32 %v2361, %v2433
      %v2506 = vadd.f32 %v2362, %v2434
      %v2507 = vadd.f32 %v2363, %v2435
      %v2508 = vadd.f32 %v2364, %v2436
      %v2509 = vadd.f32 %v2365, %v2437
      %v2510 = vadd.f32 %v2366, %v2438
      %v2511 = vadd.f32 %v2367, %v2439
      %v2512 = vadd.f32 %v2368, %v2440
      %v2513 = vadd.f32 %v2369, %v2441
      %v2514 = vadd.f32 %v2370, %v2442
      %v2515 = vadd.f32 %v2371, %v2443
      %v2516 = vadd.f32 %v2372, %v2444
      %v2517 = vadd.f32 %v2373, %v2445
      %v2518 = vadd.f32 %v2374, %v2446
      %v2519 = vadd.f32 %v2375, %v2447
      %v2520 = vadd.f32 %v2376, %v2448
      %v2521 = vadd.f32 %v2377, %v2449
      %v2522 = vadd.f32 %v2378, %v2450
      %v2523 = vadd.f32 %v2379, %v2451
      %v2524 = vadd.f32 %v2380, %v2452
      %v2525 = vadd.f32 %v2381, %v2453
      %v2526 = vadd.f32 %v2382, %v2454
      %v2527 = vadd.f32 %v2383, %v2455
      %v2528 = vadd.f32 %v2384, %v2456
      %v2529 = vadd.f32 %v2385, %v2457
      %v2530 = vadd.f32 %v2386, %v2458
      %v2531 = vadd.f32 %v2387, %v2459
      %v2532 = vmax.f32 %v2460, 0.0
      %v2533 = vmax.f32 %v2461, 0.0
      %v2534 = vmax.f32 %v2462, 0.0
      %v2535 = vmax.f32 %v2463, 0.0
      %v2536 = vmax.f32 %v2464, 0.0
      %v2537 = vmax.f32 %v2465, 0.0
      %v2538 = vmax.f32 %v2466, 0.0
      %v2539 = vmax.f32 %v2467, 0.0
      %v2540 = vmax.f32 %v2468, 0.0
      %v2541 = vmax.f32 %v2469, 0.0
      %v2542 = vmax.f32 %v2470, 0.0
      %v2543 = vmax.f32 %v2471, 0.0
      %v2544 = vmax.f32 %v2472, 0.0
      %v2545 = vmax.f32 %v2473, 0.0
      %v2546 = vmax.f32 %v2474, 0.0
      %v2547 = vmax.f32 %v2475, 0.0
      %v2548 = vmax.f32 %v2476, 0.0
      %v2549 = vmax.f32 %v2477, 0.0
      %v2550 = vmax.f32 %v2478, 0.0
      %v2551 = vmax.f32 %v2479, 0.0
      %v2552 = vmax.f32 %v2480, 0.0
      %v2553 = vmax.f32 %v2481, 0.0
      %v2554 = vmax.f32 %v2482, 0.0
      %v2555 = vmax.f32 %v2483, 0.0
      %v2556 = vmax.f32 %v2484, 0.0
      %v2557 = vmax.f32 %v2485, 0.0
      %v2558 = vmax.f32 %v2486, 0.0
      %v2559 = vmax.f32 %v2487, 0.0
      %v2560 = vmax.f32 %v2488, 0.0
      %v2561 = vmax.f32 %v2489, 0.0
      %v2562 = vmax.f32 %v2490, 0.0
      %v2563 = vmax.f32 %v2491, 0.0
      %v2564 = vmax.f32 %v2492, 0.0
      %v2565 = vmax.f32 %v2493, 0.0
      %v2566 = vmax.f32 %v2494, 0.0
      %v2567 = vmax.f32 %v2495, 0.0
      %v2568 = vmax.f32 %v2496, 0.0
      %v2569 = vmax.f32 %v2497, 0.0
      %v2570 = vmax.f32 %v2498, 0.0
      %v2571 = vmax.f32 %v2499, 0.0
      %v2572 = vmax.f32 %v2500, 0.0
      %v2573 = vmax.f32 %v2501, 0.0
      %v2574 = vmax.f32 %v2502, 0.0
      %v2575 = vmax.f32 %v2503, 0.0
      %v2576 = vmax.f32 %v2504, 0.0
      %v2577 = vmax.f32 %v2505, 0.0
      %v2578 = vmax.f32 %v2506, 0.0
      %v2579 = vmax.f32 %v2507, 0.0
      %v2580 = vmax.f32 %v2508, 0.0
      %v2581 = vmax.f32 %v2509, 0.0
      %v2582 = vmax.f32 %v2510, 0.0
      %v2583 = vmax.f32 %v2511, 0.0
      %v2584 = vmax.f32 %v2512, 0.0
      %v2585 = vmax.f32 %v2513, 0.0
      %v2586 = vmax.f32 %v2514, 0.0
      %v2587 = vmax.f32 %v2515, 0.0
      %v2588 = vmax.f32 %v2516, 0.0
      %v2589 = vmax.f32 %v2517, 0.0
      %v2590 = vmax.f32 %v2518, 0.0
      %v2591 = vmax.f32 %v2519, 0.0
      %v2592 = vmax.f32 %v2520, 0.0
      %v2593 = vmax.f32 %v2521, 0.0
      %v2594 = vmax.f32 %v2522, 0.0
      %v2595 = vmax.f32 %v2523, 0.0
      %v2596 = vmax.f32 %v2524, 0.0
      %v2597 = vmax.f32 %v2525, 0.0
      %v2598 = vmax.f32 %v2526, 0.0
      %v2599 = vmax.f32 %v2527, 0.0
      %v2600 = vmax.f32 %v2528, 0.0
      %v2601 = vmax.f32 %v2529, 0.0
      %v2602 = vmax.f32 %v2530, 0.0
      %v2603 = vmax.f32 %v2531, 0.0
      %2604 = vst [vmem:[%s327] sm:$0xff] %v2532
      %vm2605 = vcmask 556032
      %2606 = vst.msk [vmem:[%s327 + $0x8] sm:$0xff] %vm2605, %v2533
      %2607 = vst [vmem:[%s327 + $0x10] sm:$0xff] %v2534
      %2608 = vst.msk [vmem:[%s327 + $0x18] sm:$0xff] %vm2605, %v2535
      %2609 = vst [vmem:[%s327 + $0x20] sm:$0xff] %v2536
      %2610 = vst.msk [vmem:[%s327 + $0x28] sm:$0xff] %vm2605, %v2537
      %2611 = vst [vmem:[%s327 + $0x30] sm:$0xff] %v2538
      %2612 = vst.msk [vmem:[%s327 + $0x38] sm:$0xff] %vm2605, %v2539
      %2613 = vst [vmem:[%s327 + $0x40] sm:$0xff] %v2540
      %2614 = vst.msk [vmem:[%s327 + $0x48] sm:$0xff] %vm2605, %v2541
      %2615 = vst [vmem:[%s327 + $0x50] sm:$0xff] %v2542
      %2616 = vst.msk [vmem:[%s327 + $0x58] sm:$0xff] %vm2605, %v2543
      %2617 = vst [vmem:[%s327 + $0x60] sm:$0xff] %v2544
      %2618 = vst.msk [vmem:[%s327 + $0x68] sm:$0xff] %vm2605, %v2545
      %2619 = vst [vmem:[%s327 + $0x70] sm:$0xff] %v2546
      %2620 = vst.msk [vmem:[%s327 + $0x78] sm:$0xff] %vm2605, %v2547
      %2621 = vst [vmem:[%s327 + $0x80] sm:$0xff] %v2548
      %2622 = vst.msk [vmem:[%s327 + $0x88] sm:$0xff] %vm2605, %v2549
      %2623 = vst [vmem:[%s327 + $0x90] sm:$0xff] %v2550
      %2624 = vst.msk [vmem:[%s327 + $0x98] sm:$0xff] %vm2605, %v2551
      %2625 = vst [vmem:[%s327 + $0xa0] sm:$0xff] %v2552
      %2626 = vst.msk [vmem:[%s327 + $0xa8] sm:$0xff] %vm2605, %v2553
      %2627 = vst [vmem:[%s327 + $0xb0] sm:$0xff] %v2554
      %2628 = vst.msk [vmem:[%s327 + $0xb8] sm:$0xff] %vm2605, %v2555
      %2629 = vst [vmem:[%s327 + $0xc0] sm:$0xff] %v2556
      %2630 = vst.msk [vmem:[%s327 + $0xc8] sm:$0xff] %vm2605, %v2557
      %2631 = vst [vmem:[%s327 + $0xd0] sm:$0xff] %v2558
      %2632 = vst.msk [vmem:[%s327 + $0xd8] sm:$0xff] %vm2605, %v2559
      %2633 = vst [vmem:[%s327 + $0xe0] sm:$0xff] %v2560
      %2634 = vst.msk [vmem:[%s327 + $0xe8] sm:$0xff] %vm2605, %v2561
      %2635 = vst [vmem:[%s327 + $0xf0] sm:$0xff] %v2562
      %2636 = vst.msk [vmem:[%s327 + $0xf8] sm:$0xff] %vm2605, %v2563
      %2637 = vst [vmem:[%s327 + $0x100] sm:$0xff] %v2564
      %2638 = vst.msk [vmem:[%s327 + $0x108] sm:$0xff] %vm2605, %v2565
      %2639 = vst [vmem:[%s327 + $0x110] sm:$0xff] %v2566
      %2640 = vst.msk [vmem:[%s327 + $0x118] sm:$0xff] %vm2605, %v2567
      %2641 = vst [vmem:[%s327 + $0x120] sm:$0xff] %v2568
      %2642 = vst.msk [vmem:[%s327 + $0x128] sm:$0xff] %vm2605, %v2569
      %2643 = vst [vmem:[%s327 + $0x130] sm:$0xff] %v2570
      %2644 = vst.msk [vmem:[%s327 + $0x138] sm:$0xff] %vm2605, %v2571
      %2645 = vst [vmem:[%s327 + $0x140] sm:$0xff] %v2572
      %2646 = vst.msk [vmem:[%s327 + $0x148] sm:$0xff] %vm2605, %v2573
      %2647 = vst [vmem:[%s327 + $0x150] sm:$0xff] %v2574
      %2648 = vst.msk [vmem:[%s327 + $0x158] sm:$0xff] %vm2605, %v2575
      %2649 = vst [vmem:[%s327 + $0x160] sm:$0xff] %v2576
      %2650 = vst.msk [vmem:[%s327 + $0x168] sm:$0xff] %vm2605, %v2577
      %2651 = vst [vmem:[%s327 + $0x170] sm:$0xff] %v2578
      %2652 = vst.msk [vmem:[%s327 + $0x178] sm:$0xff] %vm2605, %v2579
      %2653 = vst [vmem:[%s327 + $0x180] sm:$0xff] %v2580
      %2654 = vst.msk [vmem:[%s327 + $0x188] sm:$0xff] %vm2605, %v2581
      %2655 = vst [vmem:[%s327 + $0x190] sm:$0xff] %v2582
      %2656 = vst.msk [vmem:[%s327 + $0x198] sm:$0xff] %vm2605, %v2583
      %2657 = vst [vmem:[%s327 + $0x1a0] sm:$0xff] %v2584
      %2658 = vst.msk [vmem:[%s327 + $0x1a8] sm:$0xff] %vm2605, %v2585
      %2659 = vst [vmem:[%s327 + $0x1b0] sm:$0xff] %v2586
      %2660 = vst.msk [vmem:[%s327 + $0x1b8] sm:$0xff] %vm2605, %v2587
      %2661 = vst [vmem:[%s327 + $0x1c0] sm:$0xff] %v2588
      %2662 = vst.msk [vmem:[%s327 + $0x1c8] sm:$0xff] %vm2605, %v2589
      %2663 = vst [vmem:[%s327 + $0x1d0] sm:$0xff] %v2590
      %2664 = vst.msk [vmem:[%s327 + $0x1d8] sm:$0xff] %vm2605, %v2591
      %2665 = vst [vmem:[%s327 + $0x1e0] sm:$0xff] %v2592
      %2666 = vst.msk [vmem:[%s327 + $0x1e8] sm:$0xff] %vm2605, %v2593
      %2667 = vst [vmem:[%s327 + $0x1f0] sm:$0xff] %v2594
      %2668 = vst.msk [vmem:[%s327 + $0x1f8] sm:$0xff] %vm2605, %v2595
      %2669 = vst [vmem:[%s327 + $0x200] sm:$0xff] %v2596
      %2670 = vst.msk [vmem:[%s327 + $0x208] sm:$0xff] %vm2605, %v2597
      %2671 = vst [vmem:[%s327 + $0x210] sm:$0xff] %v2598
      %2672 = vst.msk [vmem:[%s327 + $0x218] sm:$0xff] %vm2605, %v2599
      %2673 = vst [vmem:[%s327 + $0x220] sm:$0xff] %v2600
      %2674 = vst.msk [vmem:[%s327 + $0x228] sm:$0xff] %vm2605, %v2601
      %2675 = vst [vmem:[%s327 + $0x230] sm:$0xff] %v2602
      %2676 = vst.msk [vmem:[%s327 + $0x238] sm:$0xff] %vm2605, %v2603
      %s2677 = smul.u32 36, %s17
      %p2678 = scmp.lt.s32.totalorder %s2677, 71
      %s2679 = scalar_select %p2678, %s2677, 71
      %s2680 = smul.addr %s2679, 2
      %s2681 = smul.addr %s2680, 8
      %s2682 = scalar_lea.vmem %s6, %s2681
      // Predicated region
      $region45: #{tpu_custom_call.1} parent=43 // pred_check
        %p2683 = pneg %p181
      $region46: #{tpu_custom_call.1} parent=43 // pred_check_branch
        %2685 = sbr.rel (%p2683) target = $region48
      $region47: #{tpu_custom_call.1} parent=43 // pred_region
        %s2686 = smul.u32 36, %s17
      $region48: #{tpu_custom_call.1} parent=43 // pred_fallthru
        _
    $region44: #{tpu_custom_call.1} parent=5 // pred_fallthru
      _
    %p2687 = scmp.le.s32.totalorder 2, %s12
    // Predicated region
    $region49: #{tpu_custom_call.1} parent=5 // pred_check
      %p2688 = pneg %p2687
    $region50: #{tpu_custom_call.1} parent=5 // pred_check_branch
      %2690 = sbr.rel (%p2688) target = $region52
    $region51: #{tpu_custom_call.1} parent=5 // pred_region
      %s2691 = ssub.s32 %s12, 2
      // Predicated region
      $region53: #{tpu_custom_call.1} parent=51 // pred_check
        %p2692 = pneg %p187
      $region54: #{tpu_custom_call.1} parent=51 // pred_check_branch
        %2694 = sbr.rel (%p2692) target = $region56
      $region55: #{tpu_custom_call.1} parent=51 // pred_region
        %s2695 = smul.u32 36, %s18
        %p2696 = scmp.lt.s32.totalorder %s2695, 71
        %s2697 = scalar_select %p2696, %s2695, 71
        %s2698 = smul.addr %s2697, 2
        %s2699 = smul.addr %s2698, 8
        %s2700 = scalar_lea.vmem %s6, %s2699
      $region56: #{tpu_custom_call.1} parent=51 // pred_fallthru
        _
    $region52: #{tpu_custom_call.1} parent=5 // pred_fallthru
      _
  $region6: #{tpu_custom_call.1} parent=0 // loop_footer
    %s16 = sadd.s32 1, %s12
  $region7: #{tpu_custom_call.1} parent=0 // loop_footer_branch
    %11 = sbr.rel target = $region3
  $region8: #{tpu_custom_call.1} parent=0 // loop_exit
    _

</llo_original>
